<compile_context>
chip_gen: v7x
topology: tpu7x:2x2x1
jax: 0.10.0
libtpu: 0.0.40
codegen_flags: <defaults>
</compile_context>

<pallas_src>
import functools

import jax
import jax.numpy as jnp
from jax import lax
from jax.experimental import pallas as pl
from jax.experimental.pallas import tpu as pltpu

BN_EPS = 1e-5    # nn.BatchNorm1d default
GEM_EPS = 1e-6   # GeM default


# --------------------------------------------------------------------------- #
# In-kernel helpers
# --------------------------------------------------------------------------- #
def _tap_shifts(x2d, ksize):
    """Zero-padded shifted copies of x2d (rows, L), one per conv tap.

    One pltpu.roll + one select per off-centre tap, shared by every row of the
    batch tile (review: stack rows so XLU rolls act on full vregs).  The
    boundary mask uses in-block lane indices, which is correct because each
    block spans the full sequence length L.
    """
    pad = (ksize - 1) // 2
    L = x2d.shape[-1]
    lane = lax.broadcasted_iota(jnp.int32, (1, L), 1)
    shifts = []
    for t in range(ksize):
        d = t - pad
        if d == 0:
            shifts.append(x2d)
        else:
            valid = jnp.logical_and(lane + d >= 0, lane + d < L)
            shifts.append(
                jnp.where(valid, pltpu.roll(x2d, shift=(-d) % L, axis=1), 0.0))
    return shifts


def _conv_taps(shifts, w_ref, row0, cin, ksize, cout_total, L):
    """K-tap conv for one batch element as rank-1 (column x row) accumulations
    on full (cout_total, L) tiles.  At these channel counts an MXU matmul would
    run nearly empty, so the taps stay on the VPU in exact f32; large-channel
    configurations should switch this to one jnp.dot per tap."""
    acc = jnp.zeros((cout_total, L), jnp.float32)
    for ic in range(cin):
        row = row0 + ic
        for t in range(ksize):
            col = ic * ksize + t
            acc = acc + w_ref[:, col:col + 1] * shifts[t][row:row + 1, :]
    return acc


# --------------------------------------------------------------------------- #
# Kernels
# --------------------------------------------------------------------------- #
def _splat_bn_act_kernel(w_ref, fc1wt_ref, fc1b_ref, fc2w_ref, fc2b_ref,
                         bn_ref, x_ref, o_ref, *, ksize, apply_silu):
    """SplAtConv1d (radix=2, cardinality=1) + folded BatchNorm1d + optional SiLU."""
    bt, cin, L = x_ref.shape
    cout = o_ref.shape[1]
    x2d = x_ref[...].reshape(bt * cin, L).astype(jnp.float32)
    shifts = _tap_shifts(x2d, ksize)
    bn_scale = bn_ref[:, 0:1]                              # (cout, 1)
    bn_shift = bn_ref[:, 1:2]
    for b in range(bt):                                    # static batch-tile unroll
        acc = _conv_taps(shifts, w_ref, b * cin, cin, ksize, 2 * cout, L)
        y = jnp.maximum(acc, 0.0)                          # ReLU
        x1 = y[:cout, :]                                   # radix 0
        x2 = y[cout:, :]                                   # radix 1
        gap = jnp.mean(x1 + x2, axis=1, keepdims=True)     # (cout, 1) global pool
        # fc1 (1x1 conv) as mul + sublane reduce (fc1wt stored (cout, inter)).
        g = jnp.sum(fc1wt_ref[...] * gap, axis=0, keepdims=True) + fc1b_ref[...]
        g = jnp.maximum(g, 0.0)                            # (1, inter)
        # fc2 (1x1 conv) as mul + lane reduce (fc2w stored (2*cout, inter)).
        att = jnp.sum(fc2w_ref[...] * g, axis=1, keepdims=True) + fc2b_ref[...]
        a0 = att[:cout, :]                                 # (cout, 1)
        a1 = att[cout:, :]
        m = jnp.maximum(a0, a1)                            # rSoftMax over the radix pair
        e0 = jnp.exp(a0 - m)
        e1 = jnp.exp(a1 - m)
        inv = 1.0 / (e0 + e1)
        out = (e0 * inv) * x1 + (e1 * inv) * x2            # (cout, L)
        out = out * bn_scale + bn_shift                    # eval-mode BatchNorm1d
        if apply_silu:
            out = out * jax.nn.sigmoid(out)                # SiLU
        o_ref[b] = out.astype(o_ref.dtype)


def _conv_bn_kernel(w_ref, b_ref, x_ref, o_ref, *, ksize):
    """Shortcut Conv1d (bias=False) with BatchNorm1d folded into w/b."""
    bt, cin, L = x_ref.shape
    cout = o_ref.shape[1]
    x2d = x_ref[...].reshape(bt * cin, L).astype(jnp.float32)
    shifts = _tap_shifts(x2d, ksize)
    for b in range(bt):
        acc = _conv_taps(shifts, w_ref, b * cin, cin, ksize, cout, L)
        o_ref[b] = (acc + b_ref[...]).astype(o_ref.dtype)


def _gem_add_act_kernel(pp_ref, pool_ref, r_ref, s_ref, o_ref, *, eps):
    """GeM(p) pooling of both branches, residual add, final SiLU.

    F.avg_pool1d becomes one lane-dense MXU matmul with a banded (L, Lout)
    pooling matrix; x**p is computed as exp(p*log(x)) (inputs clamped to eps>0).
    """
    bt, c, L = r_ref.shape
    lout = o_ref.shape[2]
    pool = pool_ref[...]

    def gem(v2d, p, inv_p):
        z = jnp.exp(p * jnp.log(jnp.maximum(v2d, eps)))    # clamp(min=eps) ** p
        z = jnp.dot(z, pool, preferred_element_type=jnp.float32)
        return jnp.exp(inv_p * jnp.log(z))                 # ** (1/p)

    r = gem(r_ref[...].reshape(bt * c, L).astype(jnp.float32), pp_ref[0], pp_ref[1])
    s = gem(s_ref[...].reshape(bt * c, L).astype(jnp.float32), pp_ref[2], pp_ref[3])
    y = r + s
    y = y * jax.nn.sigmoid(y)                              # final SiLU
    o_ref[...] = y.reshape(bt, c, lout).astype(o_ref.dtype)


# --------------------------------------------------------------------------- #
# pallas_call wrappers
# --------------------------------------------------------------------------- #
def _full_spec(arr):
    ndim = arr.ndim
    return pl.BlockSpec(arr.shape, lambda i, _n=ndim: (0,) * _n)


def _batch_tile(batch, channels, length, itemsize=4, target_bytes=2 << 20):
    """Batch-tile size: big enough to amortize per-step pipeline overhead,
    small enough to keep >=2 'parallel' grid steps (v7x has 2 TensorCores) and
    to stay far below the double-buffered VMEM budget on v7x (64 MiB)."""
    per_batch = max(channels * length * itemsize, 1)
    bt = max(1, min(batch, target_bytes // per_batch))
    if batch >= 2:
        bt = min(bt, max(1, batch // 2))
    while batch % bt:
        bt -= 1
    return bt


def _splat_bn_act(x, w_taps, fc1wt, fc1b, fc2w, fc2b, bn, *, ksize, apply_silu,
                  block_b):
    B, cin, L = x.shape
    cout = bn.shape[0]
    kernel = functools.partial(_splat_bn_act_kernel, ksize=ksize,
                               apply_silu=apply_silu)
    flops = 2 * B * L * (2 * cout) * (cin * ksize + 2) \
        + 4 * B * cout * (fc1wt.shape[1] + 1)
    transcendentals = B * cout * (L if apply_silu else 0) + 2 * B * cout
    bytes_accessed = 4 * (B * (cin + cout) * L + w_taps.size + fc1wt.size
                          + fc1b.size + fc2w.size + fc2b.size + bn.size)
    return pl.pallas_call(
        kernel,
        out_shape=jax.ShapeDtypeStruct((B, cout, L), x.dtype),
        grid=(B // block_b,),
        in_specs=[
            _full_spec(w_taps), _full_spec(fc1wt), _full_spec(fc1b),
            _full_spec(fc2w), _full_spec(fc2b), _full_spec(bn),
            pl.BlockSpec((block_b, cin, L), lambda i: (i, 0, 0)),
        ],
        out_specs=pl.BlockSpec((block_b, cout, L), lambda i: (i, 0, 0)),
        compiler_params=pltpu.CompilerParams(dimension_semantics=("parallel",)),
        cost_estimate=pl.CostEstimate(flops=flops,
                                      transcendentals=transcendentals,
                                      bytes_accessed=bytes_accessed),
    )(w_taps, fc1wt, fc1b, fc2w, fc2b, bn, x)


def _conv_bn(x, w_taps, bias, *, ksize, block_b):
    B, cin, L = x.shape
    cout = w_taps.shape[0]
    kernel = functools.partial(_conv_bn_kernel, ksize=ksize)
    return pl.pallas_call(
        kernel,
        out_shape=jax.ShapeDtypeStruct((B, cout, L), x.dtype),
        grid=(B // block_b,),
        in_specs=[
            _full_spec(w_taps), _full_spec(bias),
            pl.BlockSpec((block_b, cin, L), lambda i: (i, 0, 0)),
        ],
        out_specs=pl.BlockSpec((block_b, cout, L), lambda i: (i, 0, 0)),
        compiler_params=pltpu.CompilerParams(dimension_semantics=("parallel",)),
        cost_estimate=pl.CostEstimate(
            flops=2 * B * L * cout * cin * ksize,
            transcendentals=0,
            bytes_accessed=4 * (B * (cin + cout) * L + w_taps.size + bias.size)),
    )(w_taps, bias, x)


def _gem_add_act(r, s, pool, pp, *, eps, block_b):
    B, c, L = r.shape
    lout = pool.shape[1]
    kernel = functools.partial(_gem_add_act_kernel, eps=eps)
    return pl.pallas_call(
        kernel,
        out_shape=jax.ShapeDtypeStruct((B, c, lout), r.dtype),
        grid=(B // block_b,),
        in_specs=[
            pl.BlockSpec(memory_space=pltpu.MemorySpace.SMEM),   # 1-D GeM exponents
            _full_spec(pool),
            pl.BlockSpec((block_b, c, L), lambda i: (i, 0, 0)),
            pl.BlockSpec((block_b, c, L), lambda i: (i, 0, 0)),
        ],
        out_specs=pl.BlockSpec((block_b, c, lout), lambda i: (i, 0, 0)),
        compiler_params=pltpu.CompilerParams(dimension_semantics=("parallel",)),
        cost_estimate=pl.CostEstimate(
            flops=4 * B * c * L * lout,
            transcendentals=5 * B * c * (2 * L + lout),
            bytes_accessed=4 * (2 * B * c * L + B * c * lout + pool.size)),
    )(pp, pool, r, s)


# --------------------------------------------------------------------------- #
# Parameter folding (pure XLA glue) and top-level forward
# --------------------------------------------------------------------------- #
def _grouped_taps(w, groups):
    """PyTorch grouped Conv1d weight (O, I/groups, K) -> dense (O, I*K) tap
    matrix (cross-group entries are zero); column index = ic_global*K + t."""
    out_ch, in_g, ksize = w.shape
    in_ch = in_g * groups
    out_g = out_ch // groups
    dense = jnp.zeros((out_ch, in_ch, ksize), jnp.float32)
    for g in range(groups):
        dense = dense.at[g * out_g:(g + 1) * out_g,
                         g * in_g:(g + 1) * in_g, :].set(
                             w[g * out_g:(g + 1) * out_g].astype(jnp.float32))
    return dense.reshape(out_ch, in_ch * ksize)


def _bn_fold(gamma, beta, mean, var, eps=BN_EPS):
    scale = gamma / jnp.sqrt(var + eps)
    return scale.astype(jnp.float32), (beta - mean * scale).astype(jnp.float32)


def _pool_matrix(L, stride):
    lout = L // stride
    rows = jnp.arange(lout * stride)
    pool = jnp.zeros((L, lout), jnp.float32)
    return pool.at[rows, rows // stride].set(1.0 / stride)


def resblock_sgem(x, params, *, ksize=3, downsample=2, block_b=None):
    """ResBlockSGeM forward (projection branch), eval-mode BatchNorm."""
    B, cin, L = x.shape
    cout = params["bn1_gamma"].shape[0]
    if block_b is None:
        block_b = _batch_tile(B, max(cin, 2 * cout), L, x.dtype.itemsize)

    # ---- fold parameters -------------------------------------------------- #
    s1_w = _grouped_taps(params["s1_conv_w"], groups=2)
    s2_w = _grouped_taps(params["s2_conv_w"], groups=2)
    bn1 = jnp.stack(_bn_fold(params["bn1_gamma"], params["bn1_beta"],
                             params["bn1_mean"], params["bn1_var"]), axis=1)
    bn2 = jnp.stack(_bn_fold(params["bn2_gamma"], params["bn2_beta"],
                             params["bn2_mean"], params["bn2_var"]), axis=1)
    sc_scale, sc_shift = _bn_fold(params["bns_gamma"], params["bns_beta"],
                                  params["bns_mean"], params["bns_var"])
    sc_w = (params["sc_conv_w"].astype(jnp.float32)
            * sc_scale[:, None, None]).reshape(cout, cin * ksize)
    sc_b = sc_shift.reshape(cout, 1)

    def fc(p, name):
        return (p[f"{name}_fc1_w"].T.astype(jnp.float32),
                p[f"{name}_fc1_b"].reshape(1, -1).astype(jnp.float32),
                p[f"{name}_fc2_w"].astype(jnp.float32),
                p[f"{name}_fc2_b"].reshape(-1, 1).astype(jnp.float32))

    s1_fc1wt, s1_fc1b, s1_fc2w, s1_fc2b = fc(params, "s1")
    s2_fc1wt, s2_fc1b, s2_fc2w, s2_fc2b = fc(params, "s2")

    pool = _pool_matrix(L, downsample)
    pp = jnp.concatenate([params["p_res"], 1.0 / params["p_res"],
                          params["p_sc"], 1.0 / params["p_sc"]]).astype(jnp.float32)

    # ---- residual branch: SplAt+BN+SiLU, SplAt+BN -------------------------- #
    r = _splat_bn_act(x, s1_w, s1_fc1wt, s1_fc1b, s1_fc2w, s1_fc2b, bn1,
                      ksize=ksize, apply_silu=True, block_b=block_b)
    r = _splat_bn_act(r, s2_w, s2_fc1wt, s2_fc1b, s2_fc2w, s2_fc2b, bn2,
                      ksize=ksize, apply_silu=False, block_b=block_b)
    # ---- shortcut branch: Conv1d + folded BN -------------------------------- #
    s = _conv_bn(x, sc_w, sc_b, ksize=ksize, block_b=block_b)
    # ---- GeM both branches, add, final SiLU --------------------------------- #
    return _gem_add_act(r, s, pool, pp, eps=GEM_EPS, block_b=block_b)


# --------------------------------------------------------------------------- #
# Pure-JAX reference (eval-mode BN), for the correctness check
# --------------------------------------------------------------------------- #
def _splat_ref(x, conv_w, fc1_w, fc1_b, fc2_w, fc2_b, *, ksize, radix=2, groups=1):
    pad = (ksize - 1) // 2
    cout = conv_w.shape[0] // radix
    y = lax.conv_general_dilated(
        x, conv_w, window_strides=(1,), padding=[(pad, pad)],
        dimension_numbers=("NCH", "OIH", "NCH"),
        feature_group_count=groups * radix, precision=lax.Precision.HIGHEST)
    y = jnp.maximum(y, 0.0)
    x1, x2 = y[:, :cout], y[:, cout:]
    gap = jnp.mean(x1 + x2, axis=2)
    g = jnp.maximum(
        jnp.einsum("bc,ic->bi", gap, fc1_w, precision=lax.Precision.HIGHEST)
        + fc1_b, 0.0)
    att = jnp.einsum("bi,oi->bo", g, fc2_w,
                     precision=lax.Precision.HIGHEST) + fc2_b
    a = jax.nn.softmax(att.reshape(x.shape[0], radix, cout), axis=1)
    return a[:, 0, :, None] * x1 + a[:, 1, :, None] * x2


def _bn_ref(v, gamma, beta, mean, var, eps=BN_EPS):
    scale = gamma / jnp.sqrt(var + eps)
    return v * scale[None, :, None] + (beta - mean * scale)[None, :, None]


def _gem_ref(v, p, kernel_size, eps=GEM_EPS):
    B, C, L = v.shape
    lout = L // kernel_size
    z = jnp.power(jnp.maximum(v, eps), p)
    z = z[:, :, :lout * kernel_size].reshape(B, C, lout, kernel_size).mean(-1)
    return jnp.power(z, 1.0 / p)


def resblock_sgem_ref(x, P, *, ksize=3, downsample=2):
    pad = (ksize - 1) // 2
    r = _splat_ref(x, P["s1_conv_w"], P["s1_fc1_w"], P["s1_fc1_b"],
                   P["s1_fc2_w"], P["s1_fc2_b"], ksize=ksize)
    r = _bn_ref(r, P["bn1_gamma"], P["bn1_beta"], P["bn1_mean"], P["bn1_var"])
    r = r * jax.nn.sigmoid(r)
    r = _splat_ref(r, P["s2_conv_w"], P["s2_fc1_w"], P["s2_fc1_b"],
                   P["s2_fc2_w"], P["s2_fc2_b"], ksize=ksize)
    r = _bn_ref(r, P["bn2_gamma"], P["bn2_beta"], P["bn2_mean"], P["bn2_var"])
    r = _gem_ref(r, P["p_res"][0], downsample)
    s = lax.conv_general_dilated(
        x, P["sc_conv_w"], window_strides=(1,), padding=[(pad, pad)],
        dimension_numbers=("NCH", "OIH", "NCH"), precision=lax.Precision.HIGHEST)
    s = _bn_ref(s, P["bns_gamma"], P["bns_beta"], P["bns_mean"], P["bns_var"])
    s = _gem_ref(s, P["p_sc"][0], downsample)
    y = r + s
    return y * jax.nn.sigmoid(y)


# --------------------------------------------------------------------------- #
if __name__ == "__main__":
    key = jax.random.PRNGKey(0)
    B, CIN, COUT, L = 2, 8, 16, 256          # L and L/downsample multiples of 128
    KSIZE, DOWNSAMPLE = 3, 2
    inter1 = max(CIN * 2 // 4, 32)           # SplAtConv1d inter_channels rule
    inter2 = max(COUT * 2 // 4, 32)

    ks = jax.random.split(key, 24)

    def nrm(k, shape, scale):
        return scale * jax.random.normal(k, shape, dtype=jnp.float32)

    P = {
        # SplAtConv1d #1 (in=CIN -> out=COUT, radix=2, groups=1, bias=False)
        "s1_conv_w": nrm(ks[0], (2 * COUT, CIN // 2, KSIZE), 0.25),
        "s1_fc1_w": nrm(ks[1], (inter1, COUT), 0.25),
        "s1_fc1_b": nrm(ks[2], (inter1,), 0.1),
        "s1_fc2_w": nrm(ks[3], (2 * COUT, inter1), 0.25),
        "s1_fc2_b": nrm(ks[4], (2 * COUT,), 0.1),
        "bn1_gamma": 1.0 + nrm(ks[5], (COUT,), 0.1),
        "bn1_beta": nrm(ks[6], (COUT,), 0.1),
        "bn1_mean": nrm(ks[7], (COUT,), 0.1),
        "bn1_var": 0.5 + jax.random.uniform(ks[8], (COUT,), dtype=jnp.float32),
        # SplAtConv1d #2 (in=COUT -> out=COUT)
        "s2_conv_w": nrm(ks[9], (2 * COUT, COUT // 2, KSIZE), 0.25),
        "s2_fc1_w": nrm(ks[10], (inter2, COUT), 0.25),
        "s2_fc1_b": nrm(ks[11], (inter2,), 0.1),
        "s2_fc2_w": nrm(ks[12], (2 * COUT, inter2), 0.25),
        "s2_fc2_b": nrm(ks[13], (2 * COUT,), 0.1),
        "bn2_gamma": 1.0 + nrm(ks[14], (COUT,), 0.1),
        "bn2_beta": nrm(ks[15], (COUT,), 0.1),
        "bn2_mean": nrm(ks[16], (COUT,), 0.1),
        "bn2_var": 0.5 + jax.random.uniform(ks[17], (COUT,), dtype=jnp.float32),
        # shortcut Conv1d + BatchNorm1d
        "sc_conv_w": nrm(ks[18], (COUT, CIN, KSIZE), 0.25),
        "bns_gamma": 1.0 + nrm(ks[19], (COUT,), 0.1),
        "bns_beta": nrm(ks[20], (COUT,), 0.1),
        "bns_mean": nrm(ks[21], (COUT,), 0.1),
        "bns_var": 0.5 + jax.random.uniform(ks[22], (COUT,), dtype=jnp.float32),
        # GeM exponents (module init: p = 3.0); residual and shortcut GeM are separate
        "p_res": jnp.array([3.0], dtype=jnp.float32),
        "p_sc": jnp.array([3.0], dtype=jnp.float32),
    }

    x = jax.random.normal(ks[23], (B, CIN, L), dtype=jnp.float32)

    out = resblock_sgem(x, P, ksize=KSIZE, downsample=DOWNSAMPLE)
    out = jax.block_until_ready(out)

    ref = resblock_sgem_ref(x, P, ksize=KSIZE, downsample=DOWNSAMPLE)
    assert out.shape == (B, COUT, L // DOWNSAMPLE), out.shape
    err = float(jnp.max(jnp.abs(out - ref)))
    # Tolerance leaves headroom for the single in-kernel MXU matmul (GeM pooling);
    # all other kernel arithmetic is exact f32 VPU work.
    assert jnp.allclose(out, ref, rtol=5e-3, atol=5e-3), f"mismatch, max|err|={err:.3e}"

    print("KERNEL_OK")
</pallas_src>

<mosaic_0001>
module attributes {stable_mosaic.version = 11 : i64} {
  func.func @_splat_bn_act_kernel(%arg0: i32, %arg1: memref<32x24xf32, #tpu.memory_space<vmem>>, %arg2: memref<16x32xf32, #tpu.memory_space<vmem>>, %arg3: memref<1x32xf32, #tpu.memory_space<vmem>>, %arg4: memref<32x32xf32, #tpu.memory_space<vmem>>, %arg5: memref<32x1xf32, #tpu.memory_space<vmem>>, %arg6: memref<16x2xf32, #tpu.memory_space<vmem>>, %arg7: memref<1x8x256xf32, #tpu.memory_space<vmem>>, %arg8: memref<1x16x256xf32, #tpu.memory_space<vmem>>) attributes {dimension_semantics = [#tpu.dimension_semantics<parallel>], iteration_bounds = array<i64: 2>, scalar_prefetch = 0 : i64, scratch_operands = 0 : i64, tpu.core_type = #tpu.core_type<tc>, window_params = [{pipeline_mode = #tpu.pipeline_mode<synchronous>, transform_indices = @transform_0, window_bounds = array<i64: 32, 24>}, {pipeline_mode = #tpu.pipeline_mode<synchronous>, transform_indices = @transform_1, window_bounds = array<i64: 16, 32>}, {pipeline_mode = #tpu.pipeline_mode<synchronous>, transform_indices = @transform_2, window_bounds = array<i64: 1, 32>}, {pipeline_mode = #tpu.pipeline_mode<synchronous>, transform_indices = @transform_3, window_bounds = array<i64: 32, 32>}, {pipeline_mode = #tpu.pipeline_mode<synchronous>, transform_indices = @transform_4, window_bounds = array<i64: 32, 1>}, {pipeline_mode = #tpu.pipeline_mode<synchronous>, transform_indices = @transform_5, window_bounds = array<i64: 16, 2>}, {transform_indices = @transform_6, window_bounds = array<i64: 1, 8, 256>}, {transform_indices = @transform_7, window_bounds = array<i64: 1, 16, 256>}]} {
    %c0 = arith.constant 0 : index
    %c0_0 = arith.constant 0 : index
    %c0_1 = arith.constant 0 : index
    %0 = vector.load %arg7[%c0, %c0_0, %c0_1] : memref<1x8x256xf32, #tpu.memory_space<vmem>>, vector<1x8x256xf32>
    %1 = vector.shape_cast %0 : vector<1x8x256xf32> to vector<8x256xf32>
    %2 = tpu.iota {dimensions = array<i32: 1>} : vector<1x256xi32>
    %c-1_i32 = arith.constant -1 : i32
    %3 = vector.broadcast %c-1_i32 : i32 to vector<1x256xi32>
    %4 = arith.addi %2, %3 : vector<1x256xi32>
    %c0_i32 = arith.constant 0 : i32
    %5 = vector.broadcast %c0_i32 : i32 to vector<1x256xi32>
    %6 = arith.cmpi sge, %4, %5 : vector<1x256xi32>
    %c-1_i32_2 = arith.constant -1 : i32
    %7 = vector.broadcast %c-1_i32_2 : i32 to vector<1x256xi32>
    %8 = arith.addi %2, %7 : vector<1x256xi32>
    %c256_i32 = arith.constant 256 : i32
    %9 = vector.broadcast %c256_i32 : i32 to vector<1x256xi32>
    %10 = arith.cmpi slt, %8, %9 : vector<1x256xi32>
    %11 = arith.andi %6, %10 : vector<1x256xi1>
    %c1_i32 = arith.constant 1 : i32
    %12 = tpu.dynamic_rotate %1 by %c1_i32 dim 1 : vector<8x256xf32>, i32 -> vector<8x256xf32>
    %cst = arith.constant 0.000000e+00 : f32
    %13 = vector.shape_cast %11 : vector<1x256xi1> to vector<1x256xi1>
    %14 = vector.broadcast %13 : vector<1x256xi1> to vector<8x256xi1>
    %15 = vector.broadcast %cst : f32 to vector<8x256xf32>
    %16 = arith.select %14, %12, %15 : vector<8x256xi1>, vector<8x256xf32>
    %c1_i32_3 = arith.constant 1 : i32
    %17 = vector.broadcast %c1_i32_3 : i32 to vector<1x256xi32>
    %18 = arith.addi %2, %17 : vector<1x256xi32>
    %c0_i32_4 = arith.constant 0 : i32
    %19 = vector.broadcast %c0_i32_4 : i32 to vector<1x256xi32>
    %20 = arith.cmpi sge, %18, %19 : vector<1x256xi32>
    %c1_i32_5 = arith.constant 1 : i32
    %21 = vector.broadcast %c1_i32_5 : i32 to vector<1x256xi32>
    %22 = arith.addi %2, %21 : vector<1x256xi32>
    %c256_i32_6 = arith.constant 256 : i32
    %23 = vector.broadcast %c256_i32_6 : i32 to vector<1x256xi32>
    %24 = arith.cmpi slt, %22, %23 : vector<1x256xi32>
    %25 = arith.andi %20, %24 : vector<1x256xi1>
    %c255_i32 = arith.constant 255 : i32
    %26 = tpu.dynamic_rotate %1 by %c255_i32 dim 1 : vector<8x256xf32>, i32 -> vector<8x256xf32>
    %cst_7 = arith.constant 0.000000e+00 : f32
    %27 = vector.shape_cast %25 : vector<1x256xi1> to vector<1x256xi1>
    %28 = vector.broadcast %27 : vector<1x256xi1> to vector<8x256xi1>
    %29 = vector.broadcast %cst_7 : f32 to vector<8x256xf32>
    %30 = arith.select %28, %26, %29 : vector<8x256xi1>, vector<8x256xf32>
    %c0_8 = arith.constant 0 : index
    %c0_9 = arith.constant 0 : index
    %31 = vector.load %arg6[%c0_8, %c0_9] : memref<16x2xf32, #tpu.memory_space<vmem>>, vector<16x1xf32>
    %c0_10 = arith.constant 0 : index
    %c1 = arith.constant 1 : index
    %32 = vector.load %arg6[%c0_10, %c1] : memref<16x2xf32, #tpu.memory_space<vmem>>, vector<16x1xf32>
    %cst_11 = arith.constant 0.000000e+00 : f32
    %33 = vector.broadcast %cst_11 : f32 to vector<32x256xf32>
    %c0_12 = arith.constant 0 : index
    %c0_13 = arith.constant 0 : index
    %34 = vector.load %arg1[%c0_12, %c0_13] : memref<32x24xf32, #tpu.memory_space<vmem>>, vector<32x1xf32>
    %35 = vector.extract_strided_slice %16 {offsets = [0, 0], sizes = [1, 256], strides = [1, 1]} : vector<8x256xf32> to vector<1x256xf32>
    %36 = vector.broadcast %34 : vector<32x1xf32> to vector<32x256xf32>
    %37 = vector.broadcast %35 : vector<1x256xf32> to vector<32x256xf32>
    %38 = arith.mulf %36, %37 : vector<32x256xf32>
    %39 = arith.addf %33, %38 : vector<32x256xf32>
    %c0_14 = arith.constant 0 : index
    %c1_15 = arith.constant 1 : index
    %40 = vector.load %arg1[%c0_14, %c1_15] : memref<32x24xf32, #tpu.memory_space<vmem>>, vector<32x1xf32>
    %41 = vector.extract_strided_slice %1 {offsets = [0, 0], sizes = [1, 256], strides = [1, 1]} : vector<8x256xf32> to vector<1x256xf32>
    %42 = vector.broadcast %40 : vector<32x1xf32> to vector<32x256xf32>
    %43 = vector.broadcast %41 : vector<1x256xf32> to vector<32x256xf32>
    %44 = arith.mulf %42, %43 : vector<32x256xf32>
    %45 = arith.addf %39, %44 : vector<32x256xf32>
    %c0_16 = arith.constant 0 : index
    %c2 = arith.constant 2 : index
    %46 = vector.load %arg1[%c0_16, %c2] : memref<32x24xf32, #tpu.memory_space<vmem>>, vector<32x1xf32>
    %47 = vector.extract_strided_slice %30 {offsets = [0, 0], sizes = [1, 256], strides = [1, 1]} : vector<8x256xf32> to vector<1x256xf32>
    %48 = vector.broadcast %46 : vector<32x1xf32> to vector<32x256xf32>
    %49 = vector.broadcast %47 : vector<1x256xf32> to vector<32x256xf32>
    %50 = arith.mulf %48, %49 : vector<32x256xf32>
    %51 = arith.addf %45, %50 : vector<32x256xf32>
    %c0_17 = arith.constant 0 : index
    %c3 = arith.constant 3 : index
    %52 = vector.load %arg1[%c0_17, %c3] : memref<32x24xf32, #tpu.memory_space<vmem>>, vector<32x1xf32>
    %53 = vector.extract_strided_slice %16 {offsets = [1, 0], sizes = [1, 256], strides = [1, 1]} : vector<8x256xf32> to vector<1x256xf32>
    %54 = vector.broadcast %52 : vector<32x1xf32> to vector<32x256xf32>
    %55 = vector.broadcast %53 : vector<1x256xf32> to vector<32x256xf32>
    %56 = arith.mulf %54, %55 : vector<32x256xf32>
    %57 = arith.addf %51, %56 : vector<32x256xf32>
    %c0_18 = arith.constant 0 : index
    %c4 = arith.constant 4 : index
    %58 = vector.load %arg1[%c0_18, %c4] : memref<32x24xf32, #tpu.memory_space<vmem>>, vector<32x1xf32>
    %59 = vector.extract_strided_slice %1 {offsets = [1, 0], sizes = [1, 256], strides = [1, 1]} : vector<8x256xf32> to vector<1x256xf32>
    %60 = vector.broadcast %58 : vector<32x1xf32> to vector<32x256xf32>
    %61 = vector.broadcast %59 : vector<1x256xf32> to vector<32x256xf32>
    %62 = arith.mulf %60, %61 : vector<32x256xf32>
    %63 = arith.addf %57, %62 : vector<32x256xf32>
    %c0_19 = arith.constant 0 : index
    %c5 = arith.constant 5 : index
    %64 = vector.load %arg1[%c0_19, %c5] : memref<32x24xf32, #tpu.memory_space<vmem>>, vector<32x1xf32>
    %65 = vector.extract_strided_slice %30 {offsets = [1, 0], sizes = [1, 256], strides = [1, 1]} : vector<8x256xf32> to vector<1x256xf32>
    %66 = vector.broadcast %64 : vector<32x1xf32> to vector<32x256xf32>
    %67 = vector.broadcast %65 : vector<1x256xf32> to vector<32x256xf32>
    %68 = arith.mulf %66, %67 : vector<32x256xf32>
    %69 = arith.addf %63, %68 : vector<32x256xf32>
    %c0_20 = arith.constant 0 : index
    %c6 = arith.constant 6 : index
    %70 = vector.load %arg1[%c0_20, %c6] : memref<32x24xf32, #tpu.memory_space<vmem>>, vector<32x1xf32>
    %71 = vector.extract_strided_slice %16 {offsets = [2, 0], sizes = [1, 256], strides = [1, 1]} : vector<8x256xf32> to vector<1x256xf32>
    %72 = vector.broadcast %70 : vector<32x1xf32> to vector<32x256xf32>
    %73 = vector.broadcast %71 : vector<1x256xf32> to vector<32x256xf32>
    %74 = arith.mulf %72, %73 : vector<32x256xf32>
    %75 = arith.addf %69, %74 : vector<32x256xf32>
    %c0_21 = arith.constant 0 : index
    %c7 = arith.constant 7 : index
    %76 = vector.load %arg1[%c0_21, %c7] : memref<32x24xf32, #tpu.memory_space<vmem>>, vector<32x1xf32>
    %77 = vector.extract_strided_slice %1 {offsets = [2, 0], sizes = [1, 256], strides = [1, 1]} : vector<8x256xf32> to vector<1x256xf32>
    %78 = vector.broadcast %76 : vector<32x1xf32> to vector<32x256xf32>
    %79 = vector.broadcast %77 : vector<1x256xf32> to vector<32x256xf32>
    %80 = arith.mulf %78, %79 : vector<32x256xf32>
    %81 = arith.addf %75, %80 : vector<32x256xf32>
    %c0_22 = arith.constant 0 : index
    %c8 = arith.constant 8 : index
    %82 = vector.load %arg1[%c0_22, %c8] : memref<32x24xf32, #tpu.memory_space<vmem>>, vector<32x1xf32>
    %83 = vector.extract_strided_slice %30 {offsets = [2, 0], sizes = [1, 256], strides = [1, 1]} : vector<8x256xf32> to vector<1x256xf32>
    %84 = vector.broadcast %82 : vector<32x1xf32> to vector<32x256xf32>
    %85 = vector.broadcast %83 : vector<1x256xf32> to vector<32x256xf32>
    %86 = arith.mulf %84, %85 : vector<32x256xf32>
    %87 = arith.addf %81, %86 : vector<32x256xf32>
    %c0_23 = arith.constant 0 : index
    %c9 = arith.constant 9 : index
    %88 = vector.load %arg1[%c0_23, %c9] : memref<32x24xf32, #tpu.memory_space<vmem>>, vector<32x1xf32>
    %89 = vector.extract_strided_slice %16 {offsets = [3, 0], sizes = [1, 256], strides = [1, 1]} : vector<8x256xf32> to vector<1x256xf32>
    %90 = vector.broadcast %88 : vector<32x1xf32> to vector<32x256xf32>
    %91 = vector.broadcast %89 : vector<1x256xf32> to vector<32x256xf32>
    %92 = arith.mulf %90, %91 : vector<32x256xf32>
    %93 = arith.addf %87, %92 : vector<32x256xf32>
    %c0_24 = arith.constant 0 : index
    %c10 = arith.constant 10 : index
    %94 = vector.load %arg1[%c0_24, %c10] : memref<32x24xf32, #tpu.memory_space<vmem>>, vector<32x1xf32>
    %95 = vector.extract_strided_slice %1 {offsets = [3, 0], sizes = [1, 256], strides = [1, 1]} : vector<8x256xf32> to vector<1x256xf32>
    %96 = vector.broadcast %94 : vector<32x1xf32> to vector<32x256xf32>
    %97 = vector.broadcast %95 : vector<1x256xf32> to vector<32x256xf32>
    %98 = arith.mulf %96, %97 : vector<32x256xf32>
    %99 = arith.addf %93, %98 : vector<32x256xf32>
    %c0_25 = arith.constant 0 : index
    %c11 = arith.constant 11 : index
    %100 = vector.load %arg1[%c0_25, %c11] : memref<32x24xf32, #tpu.memory_space<vmem>>, vector<32x1xf32>
    %101 = vector.extract_strided_slice %30 {offsets = [3, 0], sizes = [1, 256], strides = [1, 1]} : vector<8x256xf32> to vector<1x256xf32>
    %102 = vector.broadcast %100 : vector<32x1xf32> to vector<32x256xf32>
    %103 = vector.broadcast %101 : vector<1x256xf32> to vector<32x256xf32>
    %104 = arith.mulf %102, %103 : vector<32x256xf32>
    %105 = arith.addf %99, %104 : vector<32x256xf32>
    %c0_26 = arith.constant 0 : index
    %c12 = arith.constant 12 : index
    %106 = vector.load %arg1[%c0_26, %c12] : memref<32x24xf32, #tpu.memory_space<vmem>>, vector<32x1xf32>
    %107 = vector.extract_strided_slice %16 {offsets = [4, 0], sizes = [1, 256], strides = [1, 1]} : vector<8x256xf32> to vector<1x256xf32>
    %108 = vector.broadcast %106 : vector<32x1xf32> to vector<32x256xf32>
    %109 = vector.broadcast %107 : vector<1x256xf32> to vector<32x256xf32>
    %110 = arith.mulf %108, %109 : vector<32x256xf32>
    %111 = arith.addf %105, %110 : vector<32x256xf32>
    %c0_27 = arith.constant 0 : index
    %c13 = arith.constant 13 : index
    %112 = vector.load %arg1[%c0_27, %c13] : memref<32x24xf32, #tpu.memory_space<vmem>>, vector<32x1xf32>
    %113 = vector.extract_strided_slice %1 {offsets = [4, 0], sizes = [1, 256], strides = [1, 1]} : vector<8x256xf32> to vector<1x256xf32>
    %114 = vector.broadcast %112 : vector<32x1xf32> to vector<32x256xf32>
    %115 = vector.broadcast %113 : vector<1x256xf32> to vector<32x256xf32>
    %116 = arith.mulf %114, %115 : vector<32x256xf32>
    %117 = arith.addf %111, %116 : vector<32x256xf32>
    %c0_28 = arith.constant 0 : index
    %c14 = arith.constant 14 : index
    %118 = vector.load %arg1[%c0_28, %c14] : memref<32x24xf32, #tpu.memory_space<vmem>>, vector<32x1xf32>
    %119 = vector.extract_strided_slice %30 {offsets = [4, 0], sizes = [1, 256], strides = [1, 1]} : vector<8x256xf32> to vector<1x256xf32>
    %120 = vector.broadcast %118 : vector<32x1xf32> to vector<32x256xf32>
    %121 = vector.broadcast %119 : vector<1x256xf32> to vector<32x256xf32>
    %122 = arith.mulf %120, %121 : vector<32x256xf32>
    %123 = arith.addf %117, %122 : vector<32x256xf32>
    %c0_29 = arith.constant 0 : index
    %c15 = arith.constant 15 : index
    %124 = vector.load %arg1[%c0_29, %c15] : memref<32x24xf32, #tpu.memory_space<vmem>>, vector<32x1xf32>
    %125 = vector.extract_strided_slice %16 {offsets = [5, 0], sizes = [1, 256], strides = [1, 1]} : vector<8x256xf32> to vector<1x256xf32>
    %126 = vector.broadcast %124 : vector<32x1xf32> to vector<32x256xf32>
    %127 = vector.broadcast %125 : vector<1x256xf32> to vector<32x256xf32>
    %128 = arith.mulf %126, %127 : vector<32x256xf32>
    %129 = arith.addf %123, %128 : vector<32x256xf32>
    %c0_30 = arith.constant 0 : index
    %c16 = arith.constant 16 : index
    %130 = vector.load %arg1[%c0_30, %c16] : memref<32x24xf32, #tpu.memory_space<vmem>>, vector<32x1xf32>
    %131 = vector.extract_strided_slice %1 {offsets = [5, 0], sizes = [1, 256], strides = [1, 1]} : vector<8x256xf32> to vector<1x256xf32>
    %132 = vector.broadcast %130 : vector<32x1xf32> to vector<32x256xf32>
    %133 = vector.broadcast %131 : vector<1x256xf32> to vector<32x256xf32>
    %134 = arith.mulf %132, %133 : vector<32x256xf32>
    %135 = arith.addf %129, %134 : vector<32x256xf32>
    %c0_31 = arith.constant 0 : index
    %c17 = arith.constant 17 : index
    %136 = vector.load %arg1[%c0_31, %c17] : memref<32x24xf32, #tpu.memory_space<vmem>>, vector<32x1xf32>
    %137 = vector.extract_strided_slice %30 {offsets = [5, 0], sizes = [1, 256], strides = [1, 1]} : vector<8x256xf32> to vector<1x256xf32>
    %138 = vector.broadcast %136 : vector<32x1xf32> to vector<32x256xf32>
    %139 = vector.broadcast %137 : vector<1x256xf32> to vector<32x256xf32>
    %140 = arith.mulf %138, %139 : vector<32x256xf32>
    %141 = arith.addf %135, %140 : vector<32x256xf32>
    %c0_32 = arith.constant 0 : index
    %c18 = arith.constant 18 : index
    %142 = vector.load %arg1[%c0_32, %c18] : memref<32x24xf32, #tpu.memory_space<vmem>>, vector<32x1xf32>
    %143 = vector.extract_strided_slice %16 {offsets = [6, 0], sizes = [1, 256], strides = [1, 1]} : vector<8x256xf32> to vector<1x256xf32>
    %144 = vector.broadcast %142 : vector<32x1xf32> to vector<32x256xf32>
    %145 = vector.broadcast %143 : vector<1x256xf32> to vector<32x256xf32>
    %146 = arith.mulf %144, %145 : vector<32x256xf32>
    %147 = arith.addf %141, %146 : vector<32x256xf32>
    %c0_33 = arith.constant 0 : index
    %c19 = arith.constant 19 : index
    %148 = vector.load %arg1[%c0_33, %c19] : memref<32x24xf32, #tpu.memory_space<vmem>>, vector<32x1xf32>
    %149 = vector.extract_strided_slice %1 {offsets = [6, 0], sizes = [1, 256], strides = [1, 1]} : vector<8x256xf32> to vector<1x256xf32>
    %150 = vector.broadcast %148 : vector<32x1xf32> to vector<32x256xf32>
    %151 = vector.broadcast %149 : vector<1x256xf32> to vector<32x256xf32>
    %152 = arith.mulf %150, %151 : vector<32x256xf32>
    %153 = arith.addf %147, %152 : vector<32x256xf32>
    %c0_34 = arith.constant 0 : index
    %c20 = arith.constant 20 : index
    %154 = vector.load %arg1[%c0_34, %c20] : memref<32x24xf32, #tpu.memory_space<vmem>>, vector<32x1xf32>
    %155 = vector.extract_strided_slice %30 {offsets = [6, 0], sizes = [1, 256], strides = [1, 1]} : vector<8x256xf32> to vector<1x256xf32>
    %156 = vector.broadcast %154 : vector<32x1xf32> to vector<32x256xf32>
    %157 = vector.broadcast %155 : vector<1x256xf32> to vector<32x256xf32>
    %158 = arith.mulf %156, %157 : vector<32x256xf32>
    %159 = arith.addf %153, %158 : vector<32x256xf32>
    %c0_35 = arith.constant 0 : index
    %c21 = arith.constant 21 : index
    %160 = vector.load %arg1[%c0_35, %c21] : memref<32x24xf32, #tpu.memory_space<vmem>>, vector<32x1xf32>
    %161 = vector.extract_strided_slice %16 {offsets = [7, 0], sizes = [1, 256], strides = [1, 1]} : vector<8x256xf32> to vector<1x256xf32>
    %162 = vector.broadcast %160 : vector<32x1xf32> to vector<32x256xf32>
    %163 = vector.broadcast %161 : vector<1x256xf32> to vector<32x256xf32>
    %164 = arith.mulf %162, %163 : vector<32x256xf32>
    %165 = arith.addf %159, %164 : vector<32x256xf32>
    %c0_36 = arith.constant 0 : index
    %c22 = arith.constant 22 : index
    %166 = vector.load %arg1[%c0_36, %c22] : memref<32x24xf32, #tpu.memory_space<vmem>>, vector<32x1xf32>
    %167 = vector.extract_strided_slice %1 {offsets = [7, 0], sizes = [1, 256], strides = [1, 1]} : vector<8x256xf32> to vector<1x256xf32>
    %168 = vector.broadcast %166 : vector<32x1xf32> to vector<32x256xf32>
    %169 = vector.broadcast %167 : vector<1x256xf32> to vector<32x256xf32>
    %170 = arith.mulf %168, %169 : vector<32x256xf32>
    %171 = arith.addf %165, %170 : vector<32x256xf32>
    %c0_37 = arith.constant 0 : index
    %c23 = arith.constant 23 : index
    %172 = vector.load %arg1[%c0_37, %c23] : memref<32x24xf32, #tpu.memory_space<vmem>>, vector<32x1xf32>
    %173 = vector.extract_strided_slice %30 {offsets = [7, 0], sizes = [1, 256], strides = [1, 1]} : vector<8x256xf32> to vector<1x256xf32>
    %174 = vector.broadcast %172 : vector<32x1xf32> to vector<32x256xf32>
    %175 = vector.broadcast %173 : vector<1x256xf32> to vector<32x256xf32>
    %176 = arith.mulf %174, %175 : vector<32x256xf32>
    %177 = arith.addf %171, %176 : vector<32x256xf32>
    %cst_38 = arith.constant 0.000000e+00 : f32
    %178 = vector.broadcast %cst_38 : f32 to vector<32x256xf32>
    %179 = arith.maximumf %177, %178 : vector<32x256xf32>
    %180 = vector.extract_strided_slice %179 {offsets = [0, 0], sizes = [16, 256], strides = [1, 1]} : vector<32x256xf32> to vector<16x256xf32>
    %181 = vector.extract_strided_slice %179 {offsets = [16, 0], sizes = [16, 256], strides = [1, 1]} : vector<32x256xf32> to vector<16x256xf32>
    %182 = arith.addf %180, %181 : vector<16x256xf32>
    %cst_39 = arith.constant dense<0.000000e+00> : vector<16xf32>
    %183 = vector.multi_reduction <add>, %182, %cst_39 [1] : vector<16x256xf32> to vector<16xf32>
    %184 = vector.shape_cast %183 : vector<16xf32> to vector<16x1xf32>
    %cst_40 = arith.constant 2.560000e+02 : f32
    %185 = vector.broadcast %cst_40 : f32 to vector<16x1xf32>
    %186 = arith.divf %184, %185 : vector<16x1xf32>
    %c0_41 = arith.constant 0 : index
    %c0_42 = arith.constant 0 : index
    %187 = vector.load %arg2[%c0_41, %c0_42] : memref<16x32xf32, #tpu.memory_space<vmem>>, vector<16x32xf32>
    %188 = vector.broadcast %186 : vector<16x1xf32> to vector<16x32xf32>
    %189 = arith.mulf %187, %188 : vector<16x32xf32>
    %cst_43 = arith.constant dense<0.000000e+00> : vector<32xf32>
    %190 = vector.multi_reduction <add>, %189, %cst_43 [0] : vector<16x32xf32> to vector<32xf32>
    %191 = vector.shape_cast %190 : vector<32xf32> to vector<1x32xf32>
    %c0_44 = arith.constant 0 : index
    %c0_45 = arith.constant 0 : index
    %192 = vector.load %arg3[%c0_44, %c0_45] : memref<1x32xf32, #tpu.memory_space<vmem>>, vector<1x32xf32>
    %193 = arith.addf %191, %192 : vector<1x32xf32>
    %cst_46 = arith.constant 0.000000e+00 : f32
    %194 = vector.broadcast %cst_46 : f32 to vector<1x32xf32>
    %195 = arith.maximumf %193, %194 : vector<1x32xf32>
    %c0_47 = arith.constant 0 : index
    %c0_48 = arith.constant 0 : index
    %196 = vector.load %arg4[%c0_47, %c0_48] : memref<32x32xf32, #tpu.memory_space<vmem>>, vector<32x32xf32>
    %197 = vector.broadcast %195 : vector<1x32xf32> to vector<32x32xf32>
    %198 = arith.mulf %196, %197 : vector<32x32xf32>
    %cst_49 = arith.constant dense<0.000000e+00> : vector<32xf32>
    %199 = vector.multi_reduction <add>, %198, %cst_49 [1] : vector<32x32xf32> to vector<32xf32>
    %200 = vector.shape_cast %199 : vector<32xf32> to vector<32x1xf32>
    %c0_50 = arith.constant 0 : index
    %c0_51 = arith.constant 0 : index
    %201 = vector.load %arg5[%c0_50, %c0_51] : memref<32x1xf32, #tpu.memory_space<vmem>>, vector<32x1xf32>
    %202 = arith.addf %200, %201 : vector<32x1xf32>
    %203 = vector.extract_strided_slice %202 {offsets = [0, 0], sizes = [16, 1], strides = [1, 1]} : vector<32x1xf32> to vector<16x1xf32>
    %204 = vector.extract_strided_slice %202 {offsets = [16, 0], sizes = [16, 1], strides = [1, 1]} : vector<32x1xf32> to vector<16x1xf32>
    %205 = arith.maximumf %203, %204 : vector<16x1xf32>
    %206 = arith.subf %203, %205 : vector<16x1xf32>
    %207 = math.exp %206 : vector<16x1xf32>
    %208 = arith.subf %204, %205 : vector<16x1xf32>
    %209 = math.exp %208 : vector<16x1xf32>
    %210 = arith.addf %207, %209 : vector<16x1xf32>
    %cst_52 = arith.constant 1.000000e+00 : f32
    %211 = vector.broadcast %cst_52 : f32 to vector<16x1xf32>
    %212 = arith.divf %211, %210 : vector<16x1xf32>
    %213 = arith.mulf %207, %212 : vector<16x1xf32>
    %214 = vector.broadcast %213 : vector<16x1xf32> to vector<16x256xf32>
    %215 = arith.mulf %214, %180 : vector<16x256xf32>
    %216 = arith.mulf %209, %212 : vector<16x1xf32>
    %217 = vector.broadcast %216 : vector<16x1xf32> to vector<16x256xf32>
    %218 = arith.mulf %217, %181 : vector<16x256xf32>
    %219 = arith.addf %215, %218 : vector<16x256xf32>
    %220 = vector.broadcast %31 : vector<16x1xf32> to vector<16x256xf32>
    %221 = arith.mulf %219, %220 : vector<16x256xf32>
    %222 = vector.broadcast %32 : vector<16x1xf32> to vector<16x256xf32>
    %223 = arith.addf %221, %222 : vector<16x256xf32>
    %224 = arith.negf %223 : vector<16x256xf32>
    %225 = math.exp %224 : vector<16x256xf32>
    %cst_53 = arith.constant 1.000000e+00 : f32
    %226 = vector.broadcast %cst_53 : f32 to vector<16x256xf32>
    %227 = arith.addf %226, %225 : vector<16x256xf32>
    %228 = arith.divf %226, %227 : vector<16x256xf32>
    %229 = arith.mulf %223, %228 : vector<16x256xf32>
    %c0_54 = arith.constant 0 : index
    %c0_55 = arith.constant 0 : index
    %c0_56 = arith.constant 0 : index
    %230 = vector.load %arg8[%c0_54, %c0_55, %c0_56] : memref<1x16x256xf32, #tpu.memory_space<vmem>>, vector<1x16x256xf32>
    %231 = vector.shape_cast %230 : vector<1x16x256xf32> to vector<16x256xf32>
    %232 = vector.shape_cast %229 : vector<16x256xf32> to vector<1x16x256xf32>
    tpu.vector_store %arg8[%c0_54, %c0_55, %c0_56], %232 {strides = array<i32>} : memref<1x16x256xf32, #tpu.memory_space<vmem>>, vector<1x16x256xf32>,
    return
  }
  func.func @transform_0(%arg0: i32) -> (i32, i32) {
    %c0_i32 = arith.constant 0 : i32
    %c0_i32_0 = arith.constant 0 : i32
    %c0_i32_1 = arith.constant 0 : i32
    return %c0_i32, %c0_i32_0 : i32, i32
  }
  func.func @transform_1(%arg0: i32) -> (i32, i32) {
    %c0_i32 = arith.constant 0 : i32
    %c0_i32_0 = arith.constant 0 : i32
    %c0_i32_1 = arith.constant 0 : i32
    return %c0_i32, %c0_i32_0 : i32, i32
  }
  func.func @transform_2(%arg0: i32) -> (i32, i32) {
    %c0_i32 = arith.constant 0 : i32
    %c0_i32_0 = arith.constant 0 : i32
    %c0_i32_1 = arith.constant 0 : i32
    return %c0_i32, %c0_i32_0 : i32, i32
  }
  func.func @transform_3(%arg0: i32) -> (i32, i32) {
    %c0_i32 = arith.constant 0 : i32
    %c0_i32_0 = arith.constant 0 : i32
    %c0_i32_1 = arith.constant 0 : i32
    return %c0_i32, %c0_i32_0 : i32, i32
  }
  func.func @transform_4(%arg0: i32) -> (i32, i32) {
    %c0_i32 = arith.constant 0 : i32
    %c0_i32_0 = arith.constant 0 : i32
    %c0_i32_1 = arith.constant 0 : i32
    return %c0_i32, %c0_i32_0 : i32, i32
  }
  func.func @transform_5(%arg0: i32) -> (i32, i32) {
    %c0_i32 = arith.constant 0 : i32
    %c0_i32_0 = arith.constant 0 : i32
    %c0_i32_1 = arith.constant 0 : i32
    return %c0_i32, %c0_i32_0 : i32, i32
  }
  func.func @transform_6(%arg0: i32) -> (i32, i32, i32) {
    %c0_i32 = arith.constant 0 : i32
    %c0_i32_0 = arith.constant 0 : i32
    %c0_i32_1 = arith.constant 0 : i32
    return %arg0, %c0_i32, %c0_i32_0 : i32, i32, i32
  }
  func.func @transform_7(%arg0: i32) -> (i32, i32, i32) {
    %c0_i32 = arith.constant 0 : i32
    %c0_i32_0 = arith.constant 0 : i32
    %c0_i32_1 = arith.constant 0 : i32
    return %arg0, %c0_i32, %c0_i32_0 : i32, i32, i32
  }
}

</mosaic_0001>

<llo_original>
// kernel: tpu_custom_call.1
$region0: #{tpu_custom_call.1}
  #allocation0 [shape = 'u32[]', space=smem, size = 0x4, offset = 0x4, fixed_abs, tag = 'smem constant byte address 0x4 - core index']
  #allocation1 [shape = 'u32[144,128]{1,0:T(1,128)}', space=vmem, size = 0x12000, scoped, tag = 'internal scratch']
  %s0 = inlined_call_operand.vmem [shape: f32[32,24], index: 0, kind: input, shape index: {}]
  %s1 = inlined_call_operand.vmem [shape: f32[16,32], index: 1, kind: input, shape index: {}]
  %s2 = inlined_call_operand.vmem [shape: f32[1,32], index: 2, kind: input, shape index: {}]
  %s3 = inlined_call_operand.vmem [shape: f32[32,32], index: 3, kind: input, shape index: {}]
  %s4 = inlined_call_operand.vmem [shape: f32[32,1], index: 4, kind: input, shape index: {}]
  %s5 = inlined_call_operand.vmem [shape: f32[16,2], index: 5, kind: input, shape index: {}]
  %s6 = inlined_call_operand.vmem [shape: f32[2,8,256], index: 6, kind: input, shape index: {}]
  %s7 = inlined_call_operand.hbm [shape: f32[2,16,256], index: 7, kind: output, shape index: {}]
  %s8 = sld [smem:[#allocation0]]
  $region61: #{tpu_custom_call.1} parent=0
    _
  %s10 = ssub.s32 1, %s8
  %s11 = scalar_select 0, %s10, %s8
  $region1: #{tpu_custom_call.1} parent=0
    #allocation2 [shape = 'u8[32768]{0}', space=vmem, size = 0x8000, scoped, tag = 'output window, operand 0']
    #allocation3 [shape = 's32[2]{0}', space=sflag, size = 0x8, scoped, tag = 'scoped memory for tpu_custom_call.1']
    %12 = vsyncpa [#allocation3], 0
    %s13 = scalar_lea.sflag [#allocation3], 1
    %14 = vsyncpa %s13, 0
    loop: start=0, step=1, limit=4
    $region2: #{tpu_custom_call.1} parent=1 // loop_pre_header
      _
    $region3: #{tpu_custom_call.1} parent=1 // loop_header
      %s16 = sphi 0, %s20
      %p17 = scmp.ge.s32.totalorder %s16, 4
      %s24 = sphi 0, %s24
      %s26 = sphi 0, %s24
      %s27 = sphi 0, %s26
      %s41 = sphi 0, %s27
      %s45 = sphi 0, %s45
      %s47 = sphi 0, %s45
      %s48 = sphi 0, %s47
      %s62 = sphi 0, %s48
      %s66 = sphi 0, %s66
      %s68 = sphi 0, %s66
      %s69 = sphi 0, %s68
      %s83 = sphi 0, %s69
      %s87 = sphi 0, %s87
      %s89 = sphi 0, %s87
      %s90 = sphi 0, %s89
      %s104 = sphi 0, %s90
      %s108 = sphi 0, %s108
      %s110 = sphi 0, %s108
      %s111 = sphi 0, %s110
      %s125 = sphi 0, %s111
      %s129 = sphi 0, %s129
      %s131 = sphi 0, %s129
      %s132 = sphi 0, %s131
      %s146 = sphi 0, %s132
      %s152 = sphi 0, %s154
      %s155 = sphi 0, %s152
      %s156 = sphi 0, %s155
      %s172 = sphi 0, %s156
      %s178 = sphi 0, %s180
      %s181 = sphi 0, %s178
      %s182 = sphi 0, %s181
      %s198 = sphi 0, %s182
    $region4: #{tpu_custom_call.1} parent=1 // loop_header_branch
      %19 = sbr.rel (%p17) target = $region8
    $region5: #{tpu_custom_call.1} parent=1 // loop_body
      %s21 = ssub.s32 %s16, 1
      %s22 = ssub.s32 %s16, 2
      %s23 = sadd.s32 %s16, 1
      %s25 = sadd.s32 %s24, 1
      %p28 = scmp.eq.s32.totalorder %s16, 1
      %p29 = scmp.ne.s32.totalorder %s24, %s26
      %p30 = scmp.eq.s32.totalorder %s16, 0
      %p31 = por %p29, %p30
      %p32 = scmp.ne.s32.totalorder %s24, %s26
      %p33 = scmp.eq.s32.totalorder %s21, 1
      %p34 = por %p32, %p33
      %p35 = scmp.ne.s32.totalorder %s26, %s27
      %p36 = scmp.eq.s32.totalorder %s21, 0
      %p37 = por %p35, %p36
      %p38 = scmp.ne.s32.totalorder %s26, %s27
      %p39 = scmp.eq.s32.totalorder %s22, 1
      %p40 = por %p38, %p39
      %p42 = scmp.ne.s32.totalorder %s27, %s41
      %p43 = scmp.eq.s32.totalorder %s22, 0
      %p44 = por %p42, %p43
      %s46 = sadd.s32 %s45, 1
      %p49 = scmp.eq.s32.totalorder %s16, 1
      %p50 = scmp.ne.s32.totalorder %s45, %s47
      %p51 = scmp.eq.s32.totalorder %s16, 0
      %p52 = por %p50, %p51
      %p53 = scmp.ne.s32.totalorder %s45, %s47
      %p54 = scmp.eq.s32.totalorder %s21, 1
      %p55 = por %p53, %p54
      %p56 = scmp.ne.s32.totalorder %s47, %s48
      %p57 = scmp.eq.s32.totalorder %s21, 0
      %p58 = por %p56, %p57
      %p59 = scmp.ne.s32.totalorder %s47, %s48
      %p60 = scmp.eq.s32.totalorder %s22, 1
      %p61 = por %p59, %p60
      %p63 = scmp.ne.s32.totalorder %s48, %s62
      %p64 = scmp.eq.s32.totalorder %s22, 0
      %p65 = por %p63, %p64
      %s67 = sadd.s32 %s66, 1
      %p70 = scmp.eq.s32.totalorder %s16, 1
      %p71 = scmp.ne.s32.totalorder %s66, %s68
      %p72 = scmp.eq.s32.totalorder %s16, 0
      %p73 = por %p71, %p72
      %p74 = scmp.ne.s32.totalorder %s66, %s68
      %p75 = scmp.eq.s32.totalorder %s21, 1
      %p76 = por %p74, %p75
      %p77 = scmp.ne.s32.totalorder %s68, %s69
      %p78 = scmp.eq.s32.totalorder %s21, 0
      %p79 = por %p77, %p78
      %p80 = scmp.ne.s32.totalorder %s68, %s69
      %p81 = scmp.eq.s32.totalorder %s22, 1
      %p82 = por %p80, %p81
      %p84 = scmp.ne.s32.totalorder %s69, %s83
      %p85 = scmp.eq.s32.totalorder %s22, 0
      %p86 = por %p84, %p85
      %s88 = sadd.s32 %s87, 1
      %p91 = scmp.eq.s32.totalorder %s16, 1
      %p92 = scmp.ne.s32.totalorder %s87, %s89
      %p93 = scmp.eq.s32.totalorder %s16, 0
      %p94 = por %p92, %p93
      %p95 = scmp.ne.s32.totalorder %s87, %s89
      %p96 = scmp.eq.s32.totalorder %s21, 1
      %p97 = por %p95, %p96
      %p98 = scmp.ne.s32.totalorder %s89, %s90
      %p99 = scmp.eq.s32.totalorder %s21, 0
      %p100 = por %p98, %p99
      %p101 = scmp.ne.s32.totalorder %s89, %s90
      %p102 = scmp.eq.s32.totalorder %s22, 1
      %p103 = por %p101, %p102
      %p105 = scmp.ne.s32.totalorder %s90, %s104
      %p106 = scmp.eq.s32.totalorder %s22, 0
      %p107 = por %p105, %p106
      %s109 = sadd.s32 %s108, 1
      %p112 = scmp.eq.s32.totalorder %s16, 1
      %p113 = scmp.ne.s32.totalorder %s108, %s110
      %p114 = scmp.eq.s32.totalorder %s16, 0
      %p115 = por %p113, %p114
      %p116 = scmp.ne.s32.totalorder %s108, %s110
      %p117 = scmp.eq.s32.totalorder %s21, 1
      %p118 = por %p116, %p117
      %p119 = scmp.ne.s32.totalorder %s110, %s111
      %p120 = scmp.eq.s32.totalorder %s21, 0
      %p121 = por %p119, %p120
      %p122 = scmp.ne.s32.totalorder %s110, %s111
      %p123 = scmp.eq.s32.totalorder %s22, 1
      %p124 = por %p122, %p123
      %p126 = scmp.ne.s32.totalorder %s111, %s125
      %p127 = scmp.eq.s32.totalorder %s22, 0
      %p128 = por %p126, %p127
      %s130 = sadd.s32 %s129, 1
      %p133 = scmp.eq.s32.totalorder %s16, 1
      %p134 = scmp.ne.s32.totalorder %s129, %s131
      %p135 = scmp.eq.s32.totalorder %s16, 0
      %p136 = por %p134, %p135
      %p137 = scmp.ne.s32.totalorder %s129, %s131
      %p138 = scmp.eq.s32.totalorder %s21, 1
      %p139 = por %p137, %p138
      %p140 = scmp.ne.s32.totalorder %s131, %s132
      %p141 = scmp.eq.s32.totalorder %s21, 0
      %p142 = por %p140, %p141
      %p143 = scmp.ne.s32.totalorder %s131, %s132
      %p144 = scmp.eq.s32.totalorder %s22, 1
      %p145 = por %p143, %p144
      %p147 = scmp.ne.s32.totalorder %s132, %s146
      %p148 = scmp.eq.s32.totalorder %s22, 0
      %p149 = por %p147, %p148
      %s150 = ssub.s32 %s16, %s23
      %p151 = scmp.eq.s32.totalorder %s150, 0
      %s153 = sadd.s32 %s152, 1
      %s154 = scalar_select %p151, %s152, %s153
      %p157 = pneg %p151
      %p158 = scmp.eq.s32.totalorder %s16, 1
      %p159 = por %p157, %p158
      %p160 = scmp.ne.s32.totalorder %s152, %s155
      %p161 = scmp.eq.s32.totalorder %s16, 0
      %p162 = por %p160, %p161
      %p163 = scmp.ne.s32.totalorder %s152, %s155
      %p164 = scmp.eq.s32.totalorder %s21, 1
      %p165 = por %p163, %p164
      %p166 = scmp.ne.s32.totalorder %s155, %s156
      %p167 = scmp.eq.s32.totalorder %s21, 0
      %p168 = por %p166, %p167
      %p169 = scmp.ne.s32.totalorder %s155, %s156
      %p170 = scmp.eq.s32.totalorder %s22, 1
      %p171 = por %p169, %p170
      %p173 = scmp.ne.s32.totalorder %s156, %s172
      %p174 = scmp.eq.s32.totalorder %s22, 0
      %p175 = por %p173, %p174
      %s176 = ssub.s32 %s16, %s23
      %p177 = scmp.eq.s32.totalorder %s176, 0
      %s179 = sadd.s32 %s178, 1
      %s180 = scalar_select %p177, %s178, %s179
      %p183 = pneg %p177
      %p184 = scmp.eq.s32.totalorder %s16, 1
      %p185 = por %p183, %p184
      %p186 = scmp.ne.s32.totalorder %s178, %s181
      %p187 = scmp.eq.s32.totalorder %s16, 0
      %p188 = por %p186, %p187
      %p189 = scmp.ne.s32.totalorder %s178, %s181
      %p190 = scmp.eq.s32.totalorder %s21, 1
      %p191 = por %p189, %p190
      %p192 = scmp.ne.s32.totalorder %s181, %s182
      %p193 = scmp.eq.s32.totalorder %s21, 0
      %p194 = por %p192, %p193
      %p195 = scmp.ne.s32.totalorder %s181, %s182
      %p196 = scmp.eq.s32.totalorder %s22, 1
      %p197 = por %p195, %p196
      %p199 = scmp.ne.s32.totalorder %s182, %s198
      %p200 = scmp.eq.s32.totalorder %s22, 0
      %p201 = por %p199, %p200
      %p202 = scmp.le.s32.totalorder 1, %s16
      %p203 = scmp.lt.s32.totalorder %s16, 3
      %p204 = pnand %p202, %p203
      %p205 = pneg %p204
      // Predicated region
      $region9: #{tpu_custom_call.1} parent=5 // pred_check
        _
      $region10: #{tpu_custom_call.1} parent=5 // pred_check_branch
        %207 = sbr.rel (%p204) target = $region12
      $region11: #{tpu_custom_call.1} parent=5 // pred_region
        %s208 = ssub.s32 %s16, 1
        // Predicated region
        $region13: #{tpu_custom_call.1} parent=11 // pred_check
          %p209 = pneg %p37
        $region14: #{tpu_custom_call.1} parent=11 // pred_check_branch
          %211 = sbr.rel (%p209) target = $region16
        $region15: #{tpu_custom_call.1} parent=11 // pred_region
          _
        $region16: #{tpu_custom_call.1} parent=11 // pred_fallthru
          _
        // Predicated region
        $region17: #{tpu_custom_call.1} parent=11 // pred_check
          %p212 = pneg %p58
        $region18: #{tpu_custom_call.1} parent=11 // pred_check_branch
          %214 = sbr.rel (%p212) target = $region20
        $region19: #{tpu_custom_call.1} parent=11 // pred_region
          _
        $region20: #{tpu_custom_call.1} parent=11 // pred_fallthru
          _
        // Predicated region
        $region21: #{tpu_custom_call.1} parent=11 // pred_check
          %p215 = pneg %p79
        $region22: #{tpu_custom_call.1} parent=11 // pred_check_branch
          %217 = sbr.rel (%p215) target = $region24
        $region23: #{tpu_custom_call.1} parent=11 // pred_region
          _
        $region24: #{tpu_custom_call.1} parent=11 // pred_fallthru
          _
        // Predicated region
        $region25: #{tpu_custom_call.1} parent=11 // pred_check
          %p218 = pneg %p100
        $region26: #{tpu_custom_call.1} parent=11 // pred_check_branch
          %220 = sbr.rel (%p218) target = $region28
        $region27: #{tpu_custom_call.1} parent=11 // pred_region
          _
        $region28: #{tpu_custom_call.1} parent=11 // pred_fallthru
          _
        // Predicated region
        $region29: #{tpu_custom_call.1} parent=11 // pred_check
          %p221 = pneg %p121
        $region30: #{tpu_custom_call.1} parent=11 // pred_check_branch
          %223 = sbr.rel (%p221) target = $region32
        $region31: #{tpu_custom_call.1} parent=11 // pred_region
          _
        $region32: #{tpu_custom_call.1} parent=11 // pred_fallthru
          _
        // Predicated region
        $region33: #{tpu_custom_call.1} parent=11 // pred_check
          %p224 = pneg %p142
        $region34: #{tpu_custom_call.1} parent=11 // pred_check_branch
          %226 = sbr.rel (%p224) target = $region36
        $region35: #{tpu_custom_call.1} parent=11 // pred_region
          _
        $region36: #{tpu_custom_call.1} parent=11 // pred_fallthru
          _
      $region12: #{tpu_custom_call.1} parent=5 // pred_fallthru
        _
      %p227 = scmp.lt.s32.totalorder %s16, 2
      // Predicated region
      $region37: #{tpu_custom_call.1} parent=5 // pred_check
        %p228 = pneg %p227
      $region38: #{tpu_custom_call.1} parent=5 // pred_check_branch
        %230 = sbr.rel (%p228) target = $region40
      $region39: #{tpu_custom_call.1} parent=5 // pred_region
        // Predicated region
        $region41: #{tpu_custom_call.1} parent=39 // pred_check
          %p231 = pneg %p162
        $region42: #{tpu_custom_call.1} parent=39 // pred_check_branch
          %233 = sbr.rel (%p231) target = $region44
        $region43: #{tpu_custom_call.1} parent=39 // pred_region
          %p234 = scmp.lt.s32.totalorder %s16, 1
          %s235 = scalar_select %p234, %s16, 1
          %s236 = smul.addr %s235, 2
          %s237 = smul.addr %s236, 8
          %s238 = scalar_lea.vmem %s6, %s237
        $region44: #{tpu_custom_call.1} parent=39 // pred_fallthru
          _
      $region40: #{tpu_custom_call.1} parent=5 // pred_fallthru
        _
      %p239 = scmp.le.s32.totalorder 1, %s16
      %p240 = scmp.lt.s32.totalorder %s16, 3
      %p241 = pnand %p239, %p240
      %p242 = pneg %p241
      // Predicated region
      $region45: #{tpu_custom_call.1} parent=5 // pred_check
        _
      $region46: #{tpu_custom_call.1} parent=5 // pred_check_branch
        %244 = sbr.rel (%p241) target = $region48
      $region47: #{tpu_custom_call.1} parent=5 // pred_region
        %s245 = ssub.s32 %s16, 1
        %p246 = pneg %p37
        %p247 = pneg %p34
        %p248 = pneg %p58
        %p249 = pneg %p55
        %p250 = pneg %p79
        %p251 = pneg %p76
        %p252 = pneg %p100
        %p253 = pneg %p97
        %p254 = pneg %p121
        %p255 = pneg %p118
        %p256 = pneg %p142
        %p257 = pneg %p139
        %p258 = scmp.lt.s32.totalorder %s21, 1
        %s259 = scalar_select %p258, %s21, 1
        %s260 = smul.addr %s259, 2
        %s261 = smul.addr %s260, 8
        %s262 = scalar_lea.vmem %s6, %s261
        %p263 = pneg %p168
        %p264 = pneg %p165
        %p265 = pneg %p194
        %p266 = pneg %p191
        %s267 = sand.u32 %s181, 1
        %s268 = scalar_lea.sflag [#allocation3], %s267
        %s269 = sand.u32 %s181, 1
        %s270 = smul.addr %s269, 32
        %s271 = scalar_lea.vmem [#allocation2], %s270
        %p272 = scmp.lt.s32.totalorder %s21, 1
        %s273 = scalar_select %p272, %s21, 1
        %s274 = smul.addr %s273, 2
        %s275 = smul.addr %s274, 8
        %s276 = scalar_lea.vmem %s6, %s275
        %v277 = vld [vmem:[%s276] sm:$0xff]
        %v278 = vld [vmem:[%s276 + $0x8] sm:$0xff]
        %v279 = vlaneseq
        %v280 = vand.u32 %v279, 127
        %v281 = vadd.s32 %v280, 128
        %v282 = vadd.s32 %v280, 4294967295
        %v283 = vadd.s32 %v281, 4294967295
        %vm284 = vcmp.ge.s32.totalorder %v282, 0
        %vm285 = vcmp.ge.s32.totalorder %v283, 0
        %vm286 = vcmp.lt.s32.totalorder %v282, 256
        %vm287 = vcmp.lt.s32.totalorder %v283, 256
        %vm288 = vmand %vm284, %vm286
        %vm289 = vmand %vm285, %vm287
        %290 = vrot.lane.b32.xlu0 %v277, 1
        %v291 = vpop.permute.xlu0 %290
        %292 = vrot.lane.b32.xlu0 %v278, 1
        %v293 = vpop.permute.xlu0 %292
        %vm294 = vcmp.lt.s32.totalorder %v280, 1
        %v295 = vsel %vm294, %v291, %v293
        %v296 = vsel %vm294, %v293, %v291
        %v297 = vsel %vm288, 1, 0
        %v298 = vsel %vm289, 1, 0
        %vm299 = vcmp.eq.s32.totalorder %v297, 1
        %vm300 = vcmp.eq.s32.totalorder %v298, 1
        %v301 = vsel %vm299, %v296, 0.0
        %v302 = vsel %vm300, %v295, 0.0
        %v303 = vadd.s32 %v280, 1
        %v304 = vadd.s32 %v281, 1
        %vm305 = vcmp.ge.s32.totalorder %v303, 0
        %vm306 = vcmp.ge.s32.totalorder %v304, 0
        %vm307 = vcmp.lt.s32.totalorder %v303, 256
        %vm308 = vcmp.lt.s32.totalorder %v304, 256
        %vm309 = vmand %vm305, %vm307
        %vm310 = vmand %vm306, %vm308
        %311 = vrot.lane.b32.xlu0 %v277, 127
        %v312 = vpop.permute.xlu0 %311
        %313 = vrot.lane.b32.xlu0 %v278, 127
        %v314 = vpop.permute.xlu0 %313
        %vm315 = vcmp.lt.s32.totalorder %v280, 127
        %v316 = vsel %vm315, %v312, %v314
        %v317 = vsel %vm315, %v314, %v312
        %v318 = vsel %vm309, 1, 0
        %v319 = vsel %vm310, 1, 0
        %vm320 = vcmp.eq.s32.totalorder %v318, 1
        %vm321 = vcmp.eq.s32.totalorder %v319, 1
        %v322 = vsel %vm320, %v316, 0.0
        %v323 = vsel %vm321, %v317, 0.0
        %v324 = vld [vmem:[%s5] sm:$0xff]
        %v325 = vld [vmem:[%s5 + $0x8] sm:$0xff]
        %v326 = vld [vmem:[%s0] sm:$0xff]
        %v327 = vld [vmem:[%s0 + $0x8] sm:$0xff]
        %v328 = vld [vmem:[%s0 + $0x10] sm:$0xff]
        %v329 = vld [vmem:[%s0 + $0x18] sm:$0xff]
        %331 = vset.pattern.permute.xlu0 0
        %332 = vperm.xlu0 %331, %v326
        %v333 = vpop.permute.xlu0 %332
        %336 = vset.pattern.permute.xlu0 0
        %337 = vperm.xlu0 %336, %v327
        %v338 = vpop.permute.xlu0 %337
        %341 = vset.pattern.permute.xlu0 0
        %342 = vperm.xlu0 %341, %v328
        %v343 = vpop.permute.xlu0 %342
        %346 = vset.pattern.permute.xlu0 0
        %347 = vperm.xlu0 %346, %v329
        %v348 = vpop.permute.xlu0 %347
        %v350 = vlaneseq
        %v351 = vshrl.u32 %v350, 7
        %v352 = vsub.s32 0, %v351
        %v353 = vrot.slane %v301, %v352
        %v354 = vlaneseq
        %v355 = vshrl.u32 %v354, 7
        %v356 = vsub.s32 0, %v355
        %v357 = vrot.slane %v302, %v356
        %v358 = vmul.f32 %v333, %v353
        %v359 = vmul.f32 %v333, %v357
        %v360 = vmul.f32 %v338, %v353
        %v361 = vmul.f32 %v338, %v357
        %v362 = vmul.f32 %v343, %v353
        %v363 = vmul.f32 %v343, %v357
        %v364 = vmul.f32 %v348, %v353
        %v365 = vmul.f32 %v348, %v357
        %v366 = vadd.f32 %v358, 0.0
        %v367 = vadd.f32 %v359, 0.0
        %v368 = vadd.f32 %v360, 0.0
        %v369 = vadd.f32 %v361, 0.0
        %v370 = vadd.f32 %v362, 0.0
        %v371 = vadd.f32 %v363, 0.0
        %v372 = vadd.f32 %v364, 0.0
        %v373 = vadd.f32 %v365, 0.0
        %374 = vset.pattern.permute.xlu0 1
        %375 = vperm.xlu0 %374, %v326
        %v376 = vpop.permute.xlu0 %375
        %378 = vset.pattern.permute.xlu0 1
        %379 = vperm.xlu0 %378, %v327
        %v380 = vpop.permute.xlu0 %379
        %382 = vset.pattern.permute.xlu0 1
        %383 = vperm.xlu0 %382, %v328
        %v384 = vpop.permute.xlu0 %383
        %386 = vset.pattern.permute.xlu0 1
        %387 = vperm.xlu0 %386, %v329
        %v388 = vpop.permute.xlu0 %387
        %v390 = vlaneseq
        %v391 = vshrl.u32 %v390, 7
        %v392 = vsub.s32 0, %v391
        %v393 = vrot.slane %v277, %v392
        %v394 = vlaneseq
        %v395 = vshrl.u32 %v394, 7
        %v396 = vsub.s32 0, %v395
        %v397 = vrot.slane %v278, %v396
        %v398 = vmul.f32 %v376, %v393
        %v399 = vmul.f32 %v376, %v397
        %v400 = vmul.f32 %v380, %v393
        %v401 = vmul.f32 %v380, %v397
        %v402 = vmul.f32 %v384, %v393
        %v403 = vmul.f32 %v384, %v397
        %v404 = vmul.f32 %v388, %v393
        %v405 = vmul.f32 %v388, %v397
        %v406 = vadd.f32 %v366, %v398
        %v407 = vadd.f32 %v367, %v399
        %v408 = vadd.f32 %v368, %v400
        %v409 = vadd.f32 %v369, %v401
        %v410 = vadd.f32 %v370, %v402
        %v411 = vadd.f32 %v371, %v403
        %v412 = vadd.f32 %v372, %v404
        %v413 = vadd.f32 %v373, %v405
        %414 = vset.pattern.permute.xlu0 2
        %415 = vperm.xlu0 %414, %v326
        %v416 = vpop.permute.xlu0 %415
        %418 = vset.pattern.permute.xlu0 2
        %419 = vperm.xlu0 %418, %v327
        %v420 = vpop.permute.xlu0 %419
        %422 = vset.pattern.permute.xlu0 2
        %423 = vperm.xlu0 %422, %v328
        %v424 = vpop.permute.xlu0 %423
        %426 = vset.pattern.permute.xlu0 2
        %427 = vperm.xlu0 %426, %v329
        %v428 = vpop.permute.xlu0 %427
        %v430 = vlaneseq
        %v431 = vshrl.u32 %v430, 7
        %v432 = vsub.s32 0, %v431
        %v433 = vrot.slane %v322, %v432
        %v434 = vlaneseq
        %v435 = vshrl.u32 %v434, 7
        %v436 = vsub.s32 0, %v435
        %v437 = vrot.slane %v323, %v436
        %v438 = vmul.f32 %v416, %v433
        %v439 = vmul.f32 %v416, %v437
        %v440 = vmul.f32 %v420, %v433
        %v441 = vmul.f32 %v420, %v437
        %v442 = vmul.f32 %v424, %v433
        %v443 = vmul.f32 %v424, %v437
        %v444 = vmul.f32 %v428, %v433
        %v445 = vmul.f32 %v428, %v437
        %v446 = vadd.f32 %v406, %v438
        %v447 = vadd.f32 %v407, %v439
        %v448 = vadd.f32 %v408, %v440
        %v449 = vadd.f32 %v409, %v441
        %v450 = vadd.f32 %v410, %v442
        %v451 = vadd.f32 %v411, %v443
        %v452 = vadd.f32 %v412, %v444
        %v453 = vadd.f32 %v413, %v445
        %454 = vset.pattern.permute.xlu0 3
        %455 = vperm.xlu0 %454, %v326
        %v456 = vpop.permute.xlu0 %455
        %458 = vset.pattern.permute.xlu0 3
        %459 = vperm.xlu0 %458, %v327
        %v460 = vpop.permute.xlu0 %459
        %462 = vset.pattern.permute.xlu0 3
        %463 = vperm.xlu0 %462, %v328
        %v464 = vpop.permute.xlu0 %463
        %466 = vset.pattern.permute.xlu0 3
        %467 = vperm.xlu0 %466, %v329
        %v468 = vpop.permute.xlu0 %467
        %v470 = vlaneseq
        %v471 = vshrl.u32 %v470, 7
        %v472 = vsub.s32 1, %v471
        %v473 = vrot.slane %v301, %v472
        %v474 = vlaneseq
        %v475 = vshrl.u32 %v474, 7
        %v476 = vsub.s32 1, %v475
        %v477 = vrot.slane %v302, %v476
        %v478 = vmul.f32 %v456, %v473
        %v479 = vmul.f32 %v456, %v477
        %v480 = vmul.f32 %v460, %v473
        %v481 = vmul.f32 %v460, %v477
        %v482 = vmul.f32 %v464, %v473
        %v483 = vmul.f32 %v464, %v477
        %v484 = vmul.f32 %v468, %v473
        %v485 = vmul.f32 %v468, %v477
        %v486 = vadd.f32 %v446, %v478
        %v487 = vadd.f32 %v447, %v479
        %v488 = vadd.f32 %v448, %v480
        %v489 = vadd.f32 %v449, %v481
        %v490 = vadd.f32 %v450, %v482
        %v491 = vadd.f32 %v451, %v483
        %v492 = vadd.f32 %v452, %v484
        %v493 = vadd.f32 %v453, %v485
        %494 = vset.pattern.permute.xlu0 4
        %495 = vperm.xlu0 %494, %v326
        %v496 = vpop.permute.xlu0 %495
        %498 = vset.pattern.permute.xlu0 4
        %499 = vperm.xlu0 %498, %v327
        %v500 = vpop.permute.xlu0 %499
        %502 = vset.pattern.permute.xlu0 4
        %503 = vperm.xlu0 %502, %v328
        %v504 = vpop.permute.xlu0 %503
        %506 = vset.pattern.permute.xlu0 4
        %507 = vperm.xlu0 %506, %v329
        %v508 = vpop.permute.xlu0 %507
        %v510 = vlaneseq
        %v511 = vshrl.u32 %v510, 7
        %v512 = vsub.s32 1, %v511
        %v513 = vrot.slane %v277, %v512
        %v514 = vlaneseq
        %v515 = vshrl.u32 %v514, 7
        %v516 = vsub.s32 1, %v515
        %v517 = vrot.slane %v278, %v516
        %v518 = vmul.f32 %v496, %v513
        %v519 = vmul.f32 %v496, %v517
        %v520 = vmul.f32 %v500, %v513
        %v521 = vmul.f32 %v500, %v517
        %v522 = vmul.f32 %v504, %v513
        %v523 = vmul.f32 %v504, %v517
        %v524 = vmul.f32 %v508, %v513
        %v525 = vmul.f32 %v508, %v517
        %v526 = vadd.f32 %v486, %v518
        %v527 = vadd.f32 %v487, %v519
        %v528 = vadd.f32 %v488, %v520
        %v529 = vadd.f32 %v489, %v521
        %v530 = vadd.f32 %v490, %v522
        %v531 = vadd.f32 %v491, %v523
        %v532 = vadd.f32 %v492, %v524
        %v533 = vadd.f32 %v493, %v525
        %534 = vset.pattern.permute.xlu0 5
        %535 = vperm.xlu0 %534, %v326
        %v536 = vpop.permute.xlu0 %535
        %538 = vset.pattern.permute.xlu0 5
        %539 = vperm.xlu0 %538, %v327
        %v540 = vpop.permute.xlu0 %539
        %542 = vset.pattern.permute.xlu0 5
        %543 = vperm.xlu0 %542, %v328
        %v544 = vpop.permute.xlu0 %543
        %546 = vset.pattern.permute.xlu0 5
        %547 = vperm.xlu0 %546, %v329
        %v548 = vpop.permute.xlu0 %547
        %v550 = vlaneseq
        %v551 = vshrl.u32 %v550, 7
        %v552 = vsub.s32 1, %v551
        %v553 = vrot.slane %v322, %v552
        %v554 = vlaneseq
        %v555 = vshrl.u32 %v554, 7
        %v556 = vsub.s32 1, %v555
        %v557 = vrot.slane %v323, %v556
        %v558 = vmul.f32 %v536, %v553
        %v559 = vmul.f32 %v536, %v557
        %v560 = vmul.f32 %v540, %v553
        %v561 = vmul.f32 %v540, %v557
        %v562 = vmul.f32 %v544, %v553
        %v563 = vmul.f32 %v544, %v557
        %v564 = vmul.f32 %v548, %v553
        %v565 = vmul.f32 %v548, %v557
        %v566 = vadd.f32 %v526, %v558
        %v567 = vadd.f32 %v527, %v559
        %v568 = vadd.f32 %v528, %v560
        %v569 = vadd.f32 %v529, %v561
        %v570 = vadd.f32 %v530, %v562
        %v571 = vadd.f32 %v531, %v563
        %v572 = vadd.f32 %v532, %v564
        %v573 = vadd.f32 %v533, %v565
        %574 = vset.pattern.permute.xlu0 6
        %575 = vperm.xlu0 %574, %v326
        %v576 = vpop.permute.xlu0 %575
        %578 = vset.pattern.permute.xlu0 6
        %579 = vperm.xlu0 %578, %v327
        %v580 = vpop.permute.xlu0 %579
        %582 = vset.pattern.permute.xlu0 6
        %583 = vperm.xlu0 %582, %v328
        %v584 = vpop.permute.xlu0 %583
        %586 = vset.pattern.permute.xlu0 6
        %587 = vperm.xlu0 %586, %v329
        %v588 = vpop.permute.xlu0 %587
        %v590 = vlaneseq
        %v591 = vshrl.u32 %v590, 7
        %v592 = vsub.s32 2, %v591
        %v593 = vrot.slane %v301, %v592
        %v594 = vlaneseq
        %v595 = vshrl.u32 %v594, 7
        %v596 = vsub.s32 2, %v595
        %v597 = vrot.slane %v302, %v596
        %v598 = vmul.f32 %v576, %v593
        %v599 = vmul.f32 %v576, %v597
        %v600 = vmul.f32 %v580, %v593
        %v601 = vmul.f32 %v580, %v597
        %v602 = vmul.f32 %v584, %v593
        %v603 = vmul.f32 %v584, %v597
        %v604 = vmul.f32 %v588, %v593
        %v605 = vmul.f32 %v588, %v597
        %v606 = vadd.f32 %v566, %v598
        %v607 = vadd.f32 %v567, %v599
        %v608 = vadd.f32 %v568, %v600
        %v609 = vadd.f32 %v569, %v601
        %v610 = vadd.f32 %v570, %v602
        %v611 = vadd.f32 %v571, %v603
        %v612 = vadd.f32 %v572, %v604
        %v613 = vadd.f32 %v573, %v605
        %614 = vset.pattern.permute.xlu0 7
        %615 = vperm.xlu0 %614, %v326
        %v616 = vpop.permute.xlu0 %615
        %618 = vset.pattern.permute.xlu0 7
        %619 = vperm.xlu0 %618, %v327
        %v620 = vpop.permute.xlu0 %619
        %622 = vset.pattern.permute.xlu0 7
        %623 = vperm.xlu0 %622, %v328
        %v624 = vpop.permute.xlu0 %623
        %626 = vset.pattern.permute.xlu0 7
        %627 = vperm.xlu0 %626, %v329
        %v628 = vpop.permute.xlu0 %627
        %v630 = vlaneseq
        %v631 = vshrl.u32 %v630, 7
        %v632 = vsub.s32 2, %v631
        %v633 = vrot.slane %v277, %v632
        %v634 = vlaneseq
        %v635 = vshrl.u32 %v634, 7
        %v636 = vsub.s32 2, %v635
        %v637 = vrot.slane %v278, %v636
        %v638 = vmul.f32 %v616, %v633
        %v639 = vmul.f32 %v616, %v637
        %v640 = vmul.f32 %v620, %v633
        %v641 = vmul.f32 %v620, %v637
        %v642 = vmul.f32 %v624, %v633
        %v643 = vmul.f32 %v624, %v637
        %v644 = vmul.f32 %v628, %v633
        %v645 = vmul.f32 %v628, %v637
        %v646 = vadd.f32 %v606, %v638
        %v647 = vadd.f32 %v607, %v639
        %v648 = vadd.f32 %v608, %v640
        %v649 = vadd.f32 %v609, %v641
        %v650 = vadd.f32 %v610, %v642
        %v651 = vadd.f32 %v611, %v643
        %v652 = vadd.f32 %v612, %v644
        %v653 = vadd.f32 %v613, %v645
        %654 = vset.pattern.permute.xlu0 8
        %655 = vperm.xlu0 %654, %v326
        %v656 = vpop.permute.xlu0 %655
        %658 = vset.pattern.permute.xlu0 8
        %659 = vperm.xlu0 %658, %v327
        %v660 = vpop.permute.xlu0 %659
        %662 = vset.pattern.permute.xlu0 8
        %663 = vperm.xlu0 %662, %v328
        %v664 = vpop.permute.xlu0 %663
        %666 = vset.pattern.permute.xlu0 8
        %667 = vperm.xlu0 %666, %v329
        %v668 = vpop.permute.xlu0 %667
        %v670 = vlaneseq
        %v671 = vshrl.u32 %v670, 7
        %v672 = vsub.s32 2, %v671
        %v673 = vrot.slane %v322, %v672
        %v674 = vlaneseq
        %v675 = vshrl.u32 %v674, 7
        %v676 = vsub.s32 2, %v675
        %v677 = vrot.slane %v323, %v676
        %v678 = vmul.f32 %v656, %v673
        %v679 = vmul.f32 %v656, %v677
        %v680 = vmul.f32 %v660, %v673
        %v681 = vmul.f32 %v660, %v677
        %v682 = vmul.f32 %v664, %v673
        %v683 = vmul.f32 %v664, %v677
        %v684 = vmul.f32 %v668, %v673
        %v685 = vmul.f32 %v668, %v677
        %v686 = vadd.f32 %v646, %v678
        %v687 = vadd.f32 %v647, %v679
        %v688 = vadd.f32 %v648, %v680
        %v689 = vadd.f32 %v649, %v681
        %v690 = vadd.f32 %v650, %v682
        %v691 = vadd.f32 %v651, %v683
        %v692 = vadd.f32 %v652, %v684
        %v693 = vadd.f32 %v653, %v685
        %694 = vset.pattern.permute.xlu0 9
        %695 = vperm.xlu0 %694, %v326
        %v696 = vpop.permute.xlu0 %695
        %698 = vset.pattern.permute.xlu0 9
        %699 = vperm.xlu0 %698, %v327
        %v700 = vpop.permute.xlu0 %699
        %702 = vset.pattern.permute.xlu0 9
        %703 = vperm.xlu0 %702, %v328
        %v704 = vpop.permute.xlu0 %703
        %706 = vset.pattern.permute.xlu0 9
        %707 = vperm.xlu0 %706, %v329
        %v708 = vpop.permute.xlu0 %707
        %v710 = vlaneseq
        %v711 = vshrl.u32 %v710, 7
        %v712 = vsub.s32 3, %v711
        %v713 = vrot.slane %v301, %v712
        %v714 = vlaneseq
        %v715 = vshrl.u32 %v714, 7
        %v716 = vsub.s32 3, %v715
        %v717 = vrot.slane %v302, %v716
        %v718 = vmul.f32 %v696, %v713
        %v719 = vmul.f32 %v696, %v717
        %v720 = vmul.f32 %v700, %v713
        %v721 = vmul.f32 %v700, %v717
        %v722 = vmul.f32 %v704, %v713
        %v723 = vmul.f32 %v704, %v717
        %v724 = vmul.f32 %v708, %v713
        %v725 = vmul.f32 %v708, %v717
        %v726 = vadd.f32 %v686, %v718
        %v727 = vadd.f32 %v687, %v719
        %v728 = vadd.f32 %v688, %v720
        %v729 = vadd.f32 %v689, %v721
        %v730 = vadd.f32 %v690, %v722
        %v731 = vadd.f32 %v691, %v723
        %v732 = vadd.f32 %v692, %v724
        %v733 = vadd.f32 %v693, %v725
        %734 = vset.pattern.permute.xlu0 10
        %735 = vperm.xlu0 %734, %v326
        %v736 = vpop.permute.xlu0 %735
        %738 = vset.pattern.permute.xlu0 10
        %739 = vperm.xlu0 %738, %v327
        %v740 = vpop.permute.xlu0 %739
        %742 = vset.pattern.permute.xlu0 10
        %743 = vperm.xlu0 %742, %v328
        %v744 = vpop.permute.xlu0 %743
        %746 = vset.pattern.permute.xlu0 10
        %747 = vperm.xlu0 %746, %v329
        %v748 = vpop.permute.xlu0 %747
        %v750 = vlaneseq
        %v751 = vshrl.u32 %v750, 7
        %v752 = vsub.s32 3, %v751
        %v753 = vrot.slane %v277, %v752
        %v754 = vlaneseq
        %v755 = vshrl.u32 %v754, 7
        %v756 = vsub.s32 3, %v755
        %v757 = vrot.slane %v278, %v756
        %v758 = vmul.f32 %v736, %v753
        %v759 = vmul.f32 %v736, %v757
        %v760 = vmul.f32 %v740, %v753
        %v761 = vmul.f32 %v740, %v757
        %v762 = vmul.f32 %v744, %v753
        %v763 = vmul.f32 %v744, %v757
        %v764 = vmul.f32 %v748, %v753
        %v765 = vmul.f32 %v748, %v757
        %v766 = vadd.f32 %v726, %v758
        %v767 = vadd.f32 %v727, %v759
        %v768 = vadd.f32 %v728, %v760
        %v769 = vadd.f32 %v729, %v761
        %v770 = vadd.f32 %v730, %v762
        %v771 = vadd.f32 %v731, %v763
        %v772 = vadd.f32 %v732, %v764
        %v773 = vadd.f32 %v733, %v765
        %774 = vset.pattern.permute.xlu0 11
        %775 = vperm.xlu0 %774, %v326
        %v776 = vpop.permute.xlu0 %775
        %778 = vset.pattern.permute.xlu0 11
        %779 = vperm.xlu0 %778, %v327
        %v780 = vpop.permute.xlu0 %779
        %782 = vset.pattern.permute.xlu0 11
        %783 = vperm.xlu0 %782, %v328
        %v784 = vpop.permute.xlu0 %783
        %786 = vset.pattern.permute.xlu0 11
        %787 = vperm.xlu0 %786, %v329
        %v788 = vpop.permute.xlu0 %787
        %v790 = vlaneseq
        %v791 = vshrl.u32 %v790, 7
        %v792 = vsub.s32 3, %v791
        %v793 = vrot.slane %v322, %v792
        %v794 = vlaneseq
        %v795 = vshrl.u32 %v794, 7
        %v796 = vsub.s32 3, %v795
        %v797 = vrot.slane %v323, %v796
        %v798 = vmul.f32 %v776, %v793
        %v799 = vmul.f32 %v776, %v797
        %v800 = vmul.f32 %v780, %v793
        %v801 = vmul.f32 %v780, %v797
        %v802 = vmul.f32 %v784, %v793
        %v803 = vmul.f32 %v784, %v797
        %v804 = vmul.f32 %v788, %v793
        %v805 = vmul.f32 %v788, %v797
        %v806 = vadd.f32 %v766, %v798
        %v807 = vadd.f32 %v767, %v799
        %v808 = vadd.f32 %v768, %v800
        %v809 = vadd.f32 %v769, %v801
        %v810 = vadd.f32 %v770, %v802
        %v811 = vadd.f32 %v771, %v803
        %v812 = vadd.f32 %v772, %v804
        %v813 = vadd.f32 %v773, %v805
        %814 = vset.pattern.permute.xlu0 12
        %815 = vperm.xlu0 %814, %v326
        %v816 = vpop.permute.xlu0 %815
        %818 = vset.pattern.permute.xlu0 12
        %819 = vperm.xlu0 %818, %v327
        %v820 = vpop.permute.xlu0 %819
        %822 = vset.pattern.permute.xlu0 12
        %823 = vperm.xlu0 %822, %v328
        %v824 = vpop.permute.xlu0 %823
        %826 = vset.pattern.permute.xlu0 12
        %827 = vperm.xlu0 %826, %v329
        %v828 = vpop.permute.xlu0 %827
        %v830 = vlaneseq
        %v831 = vshrl.u32 %v830, 7
        %v832 = vsub.s32 4, %v831
        %v833 = vrot.slane %v301, %v832
        %v834 = vlaneseq
        %v835 = vshrl.u32 %v834, 7
        %v836 = vsub.s32 4, %v835
        %v837 = vrot.slane %v302, %v836
        %v838 = vmul.f32 %v816, %v833
        %v839 = vmul.f32 %v816, %v837
        %v840 = vmul.f32 %v820, %v833
        %v841 = vmul.f32 %v820, %v837
        %v842 = vmul.f32 %v824, %v833
        %v843 = vmul.f32 %v824, %v837
        %v844 = vmul.f32 %v828, %v833
        %v845 = vmul.f32 %v828, %v837
        %v846 = vadd.f32 %v806, %v838
        %v847 = vadd.f32 %v807, %v839
        %v848 = vadd.f32 %v808, %v840
        %v849 = vadd.f32 %v809, %v841
        %v850 = vadd.f32 %v810, %v842
        %v851 = vadd.f32 %v811, %v843
        %v852 = vadd.f32 %v812, %v844
        %v853 = vadd.f32 %v813, %v845
        %854 = vset.pattern.permute.xlu0 13
        %855 = vperm.xlu0 %854, %v326
        %v856 = vpop.permute.xlu0 %855
        %858 = vset.pattern.permute.xlu0 13
        %859 = vperm.xlu0 %858, %v327
        %v860 = vpop.permute.xlu0 %859
        %862 = vset.pattern.permute.xlu0 13
        %863 = vperm.xlu0 %862, %v328
        %v864 = vpop.permute.xlu0 %863
        %866 = vset.pattern.permute.xlu0 13
        %867 = vperm.xlu0 %866, %v329
        %v868 = vpop.permute.xlu0 %867
        %v870 = vlaneseq
        %v871 = vshrl.u32 %v870, 7
        %v872 = vsub.s32 4, %v871
        %v873 = vrot.slane %v277, %v872
        %v874 = vlaneseq
        %v875 = vshrl.u32 %v874, 7
        %v876 = vsub.s32 4, %v875
        %v877 = vrot.slane %v278, %v876
        %v878 = vmul.f32 %v856, %v873
        %v879 = vmul.f32 %v856, %v877
        %v880 = vmul.f32 %v860, %v873
        %v881 = vmul.f32 %v860, %v877
        %v882 = vmul.f32 %v864, %v873
        %v883 = vmul.f32 %v864, %v877
        %v884 = vmul.f32 %v868, %v873
        %v885 = vmul.f32 %v868, %v877
        %v886 = vadd.f32 %v846, %v878
        %v887 = vadd.f32 %v847, %v879
        %v888 = vadd.f32 %v848, %v880
        %v889 = vadd.f32 %v849, %v881
        %v890 = vadd.f32 %v850, %v882
        %v891 = vadd.f32 %v851, %v883
        %v892 = vadd.f32 %v852, %v884
        %v893 = vadd.f32 %v853, %v885
        %894 = vset.pattern.permute.xlu0 14
        %895 = vperm.xlu0 %894, %v326
        %v896 = vpop.permute.xlu0 %895
        %898 = vset.pattern.permute.xlu0 14
        %899 = vperm.xlu0 %898, %v327
        %v900 = vpop.permute.xlu0 %899
        %902 = vset.pattern.permute.xlu0 14
        %903 = vperm.xlu0 %902, %v328
        %v904 = vpop.permute.xlu0 %903
        %906 = vset.pattern.permute.xlu0 14
        %907 = vperm.xlu0 %906, %v329
        %v908 = vpop.permute.xlu0 %907
        %v910 = vlaneseq
        %v911 = vshrl.u32 %v910, 7
        %v912 = vsub.s32 4, %v911
        %v913 = vrot.slane %v322, %v912
        %v914 = vlaneseq
        %v915 = vshrl.u32 %v914, 7
        %v916 = vsub.s32 4, %v915
        %v917 = vrot.slane %v323, %v916
        %v918 = vmul.f32 %v896, %v913
        %v919 = vmul.f32 %v896, %v917
        %v920 = vmul.f32 %v900, %v913
        %v921 = vmul.f32 %v900, %v917
        %v922 = vmul.f32 %v904, %v913
        %v923 = vmul.f32 %v904, %v917
        %v924 = vmul.f32 %v908, %v913
        %v925 = vmul.f32 %v908, %v917
        %v926 = vadd.f32 %v886, %v918
        %v927 = vadd.f32 %v887, %v919
        %v928 = vadd.f32 %v888, %v920
        %v929 = vadd.f32 %v889, %v921
        %v930 = vadd.f32 %v890, %v922
        %v931 = vadd.f32 %v891, %v923
        %v932 = vadd.f32 %v892, %v924
        %v933 = vadd.f32 %v893, %v925
        %934 = vset.pattern.permute.xlu0 15
        %935 = vperm.xlu0 %934, %v326
        %v936 = vpop.permute.xlu0 %935
        %938 = vset.pattern.permute.xlu0 15
        %939 = vperm.xlu0 %938, %v327
        %v940 = vpop.permute.xlu0 %939
        %942 = vset.pattern.permute.xlu0 15
        %943 = vperm.xlu0 %942, %v328
        %v944 = vpop.permute.xlu0 %943
        %946 = vset.pattern.permute.xlu0 15
        %947 = vperm.xlu0 %946, %v329
        %v948 = vpop.permute.xlu0 %947
        %v950 = vlaneseq
        %v951 = vshrl.u32 %v950, 7
        %v952 = vsub.s32 5, %v951
        %v953 = vrot.slane %v301, %v952
        %v954 = vlaneseq
        %v955 = vshrl.u32 %v954, 7
        %v956 = vsub.s32 5, %v955
        %v957 = vrot.slane %v302, %v956
        %v958 = vmul.f32 %v936, %v953
        %v959 = vmul.f32 %v936, %v957
        %v960 = vmul.f32 %v940, %v953
        %v961 = vmul.f32 %v940, %v957
        %v962 = vmul.f32 %v944, %v953
        %v963 = vmul.f32 %v944, %v957
        %v964 = vmul.f32 %v948, %v953
        %v965 = vmul.f32 %v948, %v957
        %v966 = vadd.f32 %v926, %v958
        %v967 = vadd.f32 %v927, %v959
        %v968 = vadd.f32 %v928, %v960
        %v969 = vadd.f32 %v929, %v961
        %v970 = vadd.f32 %v930, %v962
        %v971 = vadd.f32 %v931, %v963
        %v972 = vadd.f32 %v932, %v964
        %v973 = vadd.f32 %v933, %v965
        %974 = vset.pattern.permute.xlu0 16
        %975 = vperm.xlu0 %974, %v326
        %v976 = vpop.permute.xlu0 %975
        %978 = vset.pattern.permute.xlu0 16
        %979 = vperm.xlu0 %978, %v327
        %v980 = vpop.permute.xlu0 %979
        %982 = vset.pattern.permute.xlu0 16
        %983 = vperm.xlu0 %982, %v328
        %v984 = vpop.permute.xlu0 %983
        %986 = vset.pattern.permute.xlu0 16
        %987 = vperm.xlu0 %986, %v329
        %v988 = vpop.permute.xlu0 %987
        %v990 = vlaneseq
        %v991 = vshrl.u32 %v990, 7
        %v992 = vsub.s32 5, %v991
        %v993 = vrot.slane %v277, %v992
        %v994 = vlaneseq
        %v995 = vshrl.u32 %v994, 7
        %v996 = vsub.s32 5, %v995
        %v997 = vrot.slane %v278, %v996
        %v998 = vmul.f32 %v976, %v993
        %v999 = vmul.f32 %v976, %v997
        %v1000 = vmul.f32 %v980, %v993
        %v1001 = vmul.f32 %v980, %v997
        %v1002 = vmul.f32 %v984, %v993
        %v1003 = vmul.f32 %v984, %v997
        %v1004 = vmul.f32 %v988, %v993
        %v1005 = vmul.f32 %v988, %v997
        %v1006 = vadd.f32 %v966, %v998
        %v1007 = vadd.f32 %v967, %v999
        %v1008 = vadd.f32 %v968, %v1000
        %v1009 = vadd.f32 %v969, %v1001
        %v1010 = vadd.f32 %v970, %v1002
        %v1011 = vadd.f32 %v971, %v1003
        %v1012 = vadd.f32 %v972, %v1004
        %v1013 = vadd.f32 %v973, %v1005
        %1014 = vset.pattern.permute.xlu0 17
        %1015 = vperm.xlu0 %1014, %v326
        %v1016 = vpop.permute.xlu0 %1015
        %1018 = vset.pattern.permute.xlu0 17
        %1019 = vperm.xlu0 %1018, %v327
        %v1020 = vpop.permute.xlu0 %1019
        %1022 = vset.pattern.permute.xlu0 17
        %1023 = vperm.xlu0 %1022, %v328
        %v1024 = vpop.permute.xlu0 %1023
        %1026 = vset.pattern.permute.xlu0 17
        %1027 = vperm.xlu0 %1026, %v329
        %v1028 = vpop.permute.xlu0 %1027
        %v1030 = vlaneseq
        %v1031 = vshrl.u32 %v1030, 7
        %v1032 = vsub.s32 5, %v1031
        %v1033 = vrot.slane %v322, %v1032
        %v1034 = vlaneseq
        %v1035 = vshrl.u32 %v1034, 7
        %v1036 = vsub.s32 5, %v1035
        %v1037 = vrot.slane %v323, %v1036
        %v1038 = vmul.f32 %v1016, %v1033
        %v1039 = vmul.f32 %v1016, %v1037
        %v1040 = vmul.f32 %v1020, %v1033
        %v1041 = vmul.f32 %v1020, %v1037
        %v1042 = vmul.f32 %v1024, %v1033
        %v1043 = vmul.f32 %v1024, %v1037
        %v1044 = vmul.f32 %v1028, %v1033
        %v1045 = vmul.f32 %v1028, %v1037
        %v1046 = vadd.f32 %v1006, %v1038
        %v1047 = vadd.f32 %v1007, %v1039
        %v1048 = vadd.f32 %v1008, %v1040
        %v1049 = vadd.f32 %v1009, %v1041
        %v1050 = vadd.f32 %v1010, %v1042
        %v1051 = vadd.f32 %v1011, %v1043
        %v1052 = vadd.f32 %v1012, %v1044
        %v1053 = vadd.f32 %v1013, %v1045
        %1054 = vset.pattern.permute.xlu0 18
        %1055 = vperm.xlu0 %1054, %v326
        %v1056 = vpop.permute.xlu0 %1055
        %1058 = vset.pattern.permute.xlu0 18
        %1059 = vperm.xlu0 %1058, %v327
        %v1060 = vpop.permute.xlu0 %1059
        %1062 = vset.pattern.permute.xlu0 18
        %1063 = vperm.xlu0 %1062, %v328
        %v1064 = vpop.permute.xlu0 %1063
        %1066 = vset.pattern.permute.xlu0 18
        %1067 = vperm.xlu0 %1066, %v329
        %v1068 = vpop.permute.xlu0 %1067
        %v1070 = vlaneseq
        %v1071 = vshrl.u32 %v1070, 7
        %v1072 = vsub.s32 6, %v1071
        %v1073 = vrot.slane %v301, %v1072
        %v1074 = vlaneseq
        %v1075 = vshrl.u32 %v1074, 7
        %v1076 = vsub.s32 6, %v1075
        %v1077 = vrot.slane %v302, %v1076
        %v1078 = vmul.f32 %v1056, %v1073
        %v1079 = vmul.f32 %v1056, %v1077
        %v1080 = vmul.f32 %v1060, %v1073
        %v1081 = vmul.f32 %v1060, %v1077
        %v1082 = vmul.f32 %v1064, %v1073
        %v1083 = vmul.f32 %v1064, %v1077
        %v1084 = vmul.f32 %v1068, %v1073
        %v1085 = vmul.f32 %v1068, %v1077
        %v1086 = vadd.f32 %v1046, %v1078
        %v1087 = vadd.f32 %v1047, %v1079
        %v1088 = vadd.f32 %v1048, %v1080
        %v1089 = vadd.f32 %v1049, %v1081
        %v1090 = vadd.f32 %v1050, %v1082
        %v1091 = vadd.f32 %v1051, %v1083
        %v1092 = vadd.f32 %v1052, %v1084
        %v1093 = vadd.f32 %v1053, %v1085
        %1094 = vset.pattern.permute.xlu0 19
        %1095 = vperm.xlu0 %1094, %v326
        %v1096 = vpop.permute.xlu0 %1095
        %1098 = vset.pattern.permute.xlu0 19
        %1099 = vperm.xlu0 %1098, %v327
        %v1100 = vpop.permute.xlu0 %1099
        %1102 = vset.pattern.permute.xlu0 19
        %1103 = vperm.xlu0 %1102, %v328
        %v1104 = vpop.permute.xlu0 %1103
        %1106 = vset.pattern.permute.xlu0 19
        %1107 = vperm.xlu0 %1106, %v329
        %v1108 = vpop.permute.xlu0 %1107
        %v1110 = vlaneseq
        %v1111 = vshrl.u32 %v1110, 7
        %v1112 = vsub.s32 6, %v1111
        %v1113 = vrot.slane %v277, %v1112
        %v1114 = vlaneseq
        %v1115 = vshrl.u32 %v1114, 7
        %v1116 = vsub.s32 6, %v1115
        %v1117 = vrot.slane %v278, %v1116
        %v1118 = vmul.f32 %v1096, %v1113
        %v1119 = vmul.f32 %v1096, %v1117
        %v1120 = vmul.f32 %v1100, %v1113
        %v1121 = vmul.f32 %v1100, %v1117
        %v1122 = vmul.f32 %v1104, %v1113
        %v1123 = vmul.f32 %v1104, %v1117
        %v1124 = vmul.f32 %v1108, %v1113
        %v1125 = vmul.f32 %v1108, %v1117
        %v1126 = vadd.f32 %v1086, %v1118
        %v1127 = vadd.f32 %v1087, %v1119
        %v1128 = vadd.f32 %v1088, %v1120
        %v1129 = vadd.f32 %v1089, %v1121
        %v1130 = vadd.f32 %v1090, %v1122
        %v1131 = vadd.f32 %v1091, %v1123
        %v1132 = vadd.f32 %v1092, %v1124
        %v1133 = vadd.f32 %v1093, %v1125
        %1134 = vset.pattern.permute.xlu0 20
        %1135 = vperm.xlu0 %1134, %v326
        %v1136 = vpop.permute.xlu0 %1135
        %1138 = vset.pattern.permute.xlu0 20
        %1139 = vperm.xlu0 %1138, %v327
        %v1140 = vpop.permute.xlu0 %1139
        %1142 = vset.pattern.permute.xlu0 20
        %1143 = vperm.xlu0 %1142, %v328
        %v1144 = vpop.permute.xlu0 %1143
        %1146 = vset.pattern.permute.xlu0 20
        %1147 = vperm.xlu0 %1146, %v329
        %v1148 = vpop.permute.xlu0 %1147
        %v1150 = vlaneseq
        %v1151 = vshrl.u32 %v1150, 7
        %v1152 = vsub.s32 6, %v1151
        %v1153 = vrot.slane %v322, %v1152
        %v1154 = vlaneseq
        %v1155 = vshrl.u32 %v1154, 7
        %v1156 = vsub.s32 6, %v1155
        %v1157 = vrot.slane %v323, %v1156
        %v1158 = vmul.f32 %v1136, %v1153
        %v1159 = vmul.f32 %v1136, %v1157
        %v1160 = vmul.f32 %v1140, %v1153
        %v1161 = vmul.f32 %v1140, %v1157
        %v1162 = vmul.f32 %v1144, %v1153
        %v1163 = vmul.f32 %v1144, %v1157
        %v1164 = vmul.f32 %v1148, %v1153
        %v1165 = vmul.f32 %v1148, %v1157
        %v1166 = vadd.f32 %v1126, %v1158
        %v1167 = vadd.f32 %v1127, %v1159
        %v1168 = vadd.f32 %v1128, %v1160
        %v1169 = vadd.f32 %v1129, %v1161
        %v1170 = vadd.f32 %v1130, %v1162
        %v1171 = vadd.f32 %v1131, %v1163
        %v1172 = vadd.f32 %v1132, %v1164
        %v1173 = vadd.f32 %v1133, %v1165
        %1174 = vset.pattern.permute.xlu0 21
        %1175 = vperm.xlu0 %1174, %v326
        %v1176 = vpop.permute.xlu0 %1175
        %1178 = vset.pattern.permute.xlu0 21
        %1179 = vperm.xlu0 %1178, %v327
        %v1180 = vpop.permute.xlu0 %1179
        %1182 = vset.pattern.permute.xlu0 21
        %1183 = vperm.xlu0 %1182, %v328
        %v1184 = vpop.permute.xlu0 %1183
        %1186 = vset.pattern.permute.xlu0 21
        %1187 = vperm.xlu0 %1186, %v329
        %v1188 = vpop.permute.xlu0 %1187
        %v1190 = vlaneseq
        %v1191 = vshrl.u32 %v1190, 7
        %v1192 = vsub.s32 7, %v1191
        %v1193 = vrot.slane %v301, %v1192
        %v1194 = vlaneseq
        %v1195 = vshrl.u32 %v1194, 7
        %v1196 = vsub.s32 7, %v1195
        %v1197 = vrot.slane %v302, %v1196
        %v1198 = vmul.f32 %v1176, %v1193
        %v1199 = vmul.f32 %v1176, %v1197
        %v1200 = vmul.f32 %v1180, %v1193
        %v1201 = vmul.f32 %v1180, %v1197
        %v1202 = vmul.f32 %v1184, %v1193
        %v1203 = vmul.f32 %v1184, %v1197
        %v1204 = vmul.f32 %v1188, %v1193
        %v1205 = vmul.f32 %v1188, %v1197
        %v1206 = vadd.f32 %v1166, %v1198
        %v1207 = vadd.f32 %v1167, %v1199
        %v1208 = vadd.f32 %v1168, %v1200
        %v1209 = vadd.f32 %v1169, %v1201
        %v1210 = vadd.f32 %v1170, %v1202
        %v1211 = vadd.f32 %v1171, %v1203
        %v1212 = vadd.f32 %v1172, %v1204
        %v1213 = vadd.f32 %v1173, %v1205
        %1214 = vset.pattern.permute.xlu0 22
        %1215 = vperm.xlu0 %1214, %v326
        %v1216 = vpop.permute.xlu0 %1215
        %1218 = vset.pattern.permute.xlu0 22
        %1219 = vperm.xlu0 %1218, %v327
        %v1220 = vpop.permute.xlu0 %1219
        %1222 = vset.pattern.permute.xlu0 22
        %1223 = vperm.xlu0 %1222, %v328
        %v1224 = vpop.permute.xlu0 %1223
        %1226 = vset.pattern.permute.xlu0 22
        %1227 = vperm.xlu0 %1226, %v329
        %v1228 = vpop.permute.xlu0 %1227
        %v1230 = vlaneseq
        %v1231 = vshrl.u32 %v1230, 7
        %v1232 = vsub.s32 7, %v1231
        %v1233 = vrot.slane %v277, %v1232
        %v1234 = vlaneseq
        %v1235 = vshrl.u32 %v1234, 7
        %v1236 = vsub.s32 7, %v1235
        %v1237 = vrot.slane %v278, %v1236
        %v1238 = vmul.f32 %v1216, %v1233
        %v1239 = vmul.f32 %v1216, %v1237
        %v1240 = vmul.f32 %v1220, %v1233
        %v1241 = vmul.f32 %v1220, %v1237
        %v1242 = vmul.f32 %v1224, %v1233
        %v1243 = vmul.f32 %v1224, %v1237
        %v1244 = vmul.f32 %v1228, %v1233
        %v1245 = vmul.f32 %v1228, %v1237
        %v1246 = vadd.f32 %v1206, %v1238
        %v1247 = vadd.f32 %v1207, %v1239
        %v1248 = vadd.f32 %v1208, %v1240
        %v1249 = vadd.f32 %v1209, %v1241
        %v1250 = vadd.f32 %v1210, %v1242
        %v1251 = vadd.f32 %v1211, %v1243
        %v1252 = vadd.f32 %v1212, %v1244
        %v1253 = vadd.f32 %v1213, %v1245
        %1254 = vset.pattern.permute.xlu0 23
        %1255 = vperm.xlu0 %1254, %v326
        %v1256 = vpop.permute.xlu0 %1255
        %1258 = vset.pattern.permute.xlu0 23
        %1259 = vperm.xlu0 %1258, %v327
        %v1260 = vpop.permute.xlu0 %1259
        %1262 = vset.pattern.permute.xlu0 23
        %1263 = vperm.xlu0 %1262, %v328
        %v1264 = vpop.permute.xlu0 %1263
        %1266 = vset.pattern.permute.xlu0 23
        %1267 = vperm.xlu0 %1266, %v329
        %v1268 = vpop.permute.xlu0 %1267
        %v1270 = vlaneseq
        %v1271 = vshrl.u32 %v1270, 7
        %v1272 = vsub.s32 7, %v1271
        %v1273 = vrot.slane %v322, %v1272
        %v1274 = vlaneseq
        %v1275 = vshrl.u32 %v1274, 7
        %v1276 = vsub.s32 7, %v1275
        %v1277 = vrot.slane %v323, %v1276
        %v1278 = vmul.f32 %v1256, %v1273
        %v1279 = vmul.f32 %v1256, %v1277
        %v1280 = vmul.f32 %v1260, %v1273
        %v1281 = vmul.f32 %v1260, %v1277
        %v1282 = vmul.f32 %v1264, %v1273
        %v1283 = vmul.f32 %v1264, %v1277
        %v1284 = vmul.f32 %v1268, %v1273
        %v1285 = vmul.f32 %v1268, %v1277
        %v1286 = vadd.f32 %v1246, %v1278
        %v1287 = vadd.f32 %v1247, %v1279
        %v1288 = vadd.f32 %v1248, %v1280
        %v1289 = vadd.f32 %v1249, %v1281
        %v1290 = vadd.f32 %v1250, %v1282
        %v1291 = vadd.f32 %v1251, %v1283
        %v1292 = vadd.f32 %v1252, %v1284
        %v1293 = vadd.f32 %v1253, %v1285
        %v1294 = vmax.f32 %v1286, 0.0
        %v1295 = vmax.f32 %v1287, 0.0
        %v1296 = vmax.f32 %v1288, 0.0
        %v1297 = vmax.f32 %v1289, 0.0
        %v1298 = vmax.f32 %v1290, 0.0
        %v1299 = vmax.f32 %v1291, 0.0
        %v1300 = vmax.f32 %v1292, 0.0
        %v1301 = vmax.f32 %v1293, 0.0
        %v1302 = vadd.f32 %v1294, %v1298
        %v1303 = vadd.f32 %v1295, %v1299
        %v1304 = vadd.f32 %v1296, %v1300
        %v1305 = vadd.f32 %v1297, %v1301
        %v1306 = vadd.f32 %v1302, %v1303
        %1307 = vadd.xlane.f32.xlu0 %v1306
        %v1308 = vpop.xlane.xlu0 %1307
        %v1309 = vadd.f32 %v1304, %v1305
        %1310 = vadd.xlane.f32.xlu0 %v1309
        %v1311 = vpop.xlane.xlu0 %1310
        %v1312 = vrcp.pop 256.0
        %v1313 = vmul.f32 %v1308, %v1312
        %v1314 = vmul.f32 %v1311, %v1312
        %v1315 = vld [vmem:[%s1] sm:$0xff]
        %v1316 = vld [vmem:[%s1 + $0x8] sm:$0xff]
        %v1317 = vmul.f32 %v1315, %v1313
        %v1318 = vmul.f32 %v1316, %v1314
        %vm1319 = vcmask 261120
        %v1320 = vsel %vm1319, %v1317, 0.0
        %v1321 = vsel %vm1319, %v1318, 0.0
        %v1322 = vadd.f32 %v1320, %v1321
        %v1323 = vrot.slane %v1322, 4
        %v1324 = vadd.f32 %v1322, %v1323
        %v1325 = vrot.slane %v1324, 2
        %v1326 = vadd.f32 %v1324, %v1325
        %v1327 = vrot.slane %v1326, 1
        %v1328 = vadd.f32 %v1326, %v1327
        %v1329 = vld [vmem:[%s2] sm:$0x1]
        %v1330 = vadd.f32 %v1328, %v1329
        %v1331 = vmax.f32 %v1330, 0.0
        %v1332 = vld [vmem:[%s3] sm:$0xff]
        %v1333 = vld [vmem:[%s3 + $0x8] sm:$0xff]
        %v1334 = vld [vmem:[%s3 + $0x10] sm:$0xff]
        %v1335 = vld [vmem:[%s3 + $0x18] sm:$0xff]
        %v1336 = vlaneseq
        %v1337 = vshrl.u32 %v1336, 7
        %v1338 = vsub.s32 0, %v1337
        %v1339 = vrot.slane %v1331, %v1338
        %v1340 = vmul.f32 %v1332, %v1339
        %v1341 = vmul.f32 %v1333, %v1339
        %v1342 = vmul.f32 %v1334, %v1339
        %v1343 = vmul.f32 %v1335, %v1339
        %v1344 = vsel %vm1319, %v1340, 0.0
        %1345 = vadd.xlane.f32.xlu0 %v1344
        %v1346 = vpop.xlane.xlu0 %1345
        %v1347 = vsel %vm1319, %v1341, 0.0
        %1348 = vadd.xlane.f32.xlu0 %v1347
        %v1349 = vpop.xlane.xlu0 %1348
        %v1350 = vsel %vm1319, %v1342, 0.0
        %1351 = vadd.xlane.f32.xlu0 %v1350
        %v1352 = vpop.xlane.xlu0 %1351
        %v1353 = vsel %vm1319, %v1343, 0.0
        %1354 = vadd.xlane.f32.xlu0 %v1353
        %v1355 = vpop.xlane.xlu0 %1354
        %v1356 = vld [vmem:[%s4] sm:$0xff]
        %v1357 = vld [vmem:[%s4 + $0x8] sm:$0xff]
        %v1358 = vld [vmem:[%s4 + $0x10] sm:$0xff]
        %v1359 = vld [vmem:[%s4 + $0x18] sm:$0xff]
        %v1360 = vadd.f32 %v1346, %v1356
        %v1361 = vadd.f32 %v1349, %v1357
        %v1362 = vadd.f32 %v1352, %v1358
        %v1363 = vadd.f32 %v1355, %v1359
        %v1364 = vmax.f32 %v1360, %v1362
        %v1365 = vmax.f32 %v1361, %v1363
        %v1366 = vsub.f32 %v1360, %v1364
        %v1367 = vsub.f32 %v1361, %v1365
        %v1368 = vmul.f32 %v1366, 1.442695
        %v1369 = vpow.pop %v1368
        %v1370 = vmul.f32 %v1367, 1.442695
        %v1371 = vpow.pop %v1370
        %v1372 = vsub.f32 %v1362, %v1364
        %v1373 = vsub.f32 %v1363, %v1365
        %v1374 = vmul.f32 %v1372, 1.442695
        %v1375 = vpow.pop %v1374
        %v1376 = vmul.f32 %v1373, 1.442695
        %v1377 = vpow.pop %v1376
        %v1378 = vadd.f32 %v1369, %v1375
        %v1379 = vadd.f32 %v1371, %v1377
        %v1380 = vrcp.pop %v1378
        %v1381 = vmul.f32 1.0, %v1380
        %v1382 = vrcp.pop %v1379
        %v1383 = vmul.f32 1.0, %v1382
        %v1384 = vmul.f32 %v1369, %v1381
        %v1385 = vmul.f32 %v1371, %v1383
        %1387 = vset.pattern.permute.xlu0 0
        %1388 = vperm.xlu0 %1387, %v1384
        %v1389 = vpop.permute.xlu0 %1388
        %1392 = vset.pattern.permute.xlu0 0
        %1393 = vperm.xlu0 %1392, %v1385
        %v1394 = vpop.permute.xlu0 %1393
        %v1396 = vmul.f32 %v1389, %v1294
        %v1397 = vmul.f32 %v1389, %v1295
        %v1398 = vmul.f32 %v1394, %v1296
        %v1399 = vmul.f32 %v1394, %v1297
        %v1400 = vmul.f32 %v1375, %v1381
        %v1401 = vmul.f32 %v1377, %v1383
        %1403 = vset.pattern.permute.xlu0 0
        %1404 = vperm.xlu0 %1403, %v1400
        %v1405 = vpop.permute.xlu0 %1404
        %1408 = vset.pattern.permute.xlu0 0
        %1409 = vperm.xlu0 %1408, %v1401
        %v1410 = vpop.permute.xlu0 %1409
        %v1412 = vmul.f32 %v1405, %v1298
        %v1413 = vmul.f32 %v1405, %v1299
        %v1414 = vmul.f32 %v1410, %v1300
        %v1415 = vmul.f32 %v1410, %v1301
        %v1416 = vadd.f32 %v1396, %v1412
        %v1417 = vadd.f32 %v1397, %v1413
        %v1418 = vadd.f32 %v1398, %v1414
        %v1419 = vadd.f32 %v1399, %v1415
        %1421 = vset.pattern.permute.xlu0 0
        %1422 = vperm.xlu0 %1421, %v324
        %v1423 = vpop.permute.xlu0 %1422
        %1426 = vset.pattern.permute.xlu0 0
        %1427 = vperm.xlu0 %1426, %v325
        %v1428 = vpop.permute.xlu0 %1427
        %v1430 = vmul.f32 %v1416, %v1423
        %v1431 = vmul.f32 %v1417, %v1423
        %v1432 = vmul.f32 %v1418, %v1428
        %v1433 = vmul.f32 %v1419, %v1428
        %1434 = vset.pattern.permute.xlu0 1
        %1435 = vperm.xlu0 %1434, %v324
        %v1436 = vpop.permute.xlu0 %1435
        %1438 = vset.pattern.permute.xlu0 1
        %1439 = vperm.xlu0 %1438, %v325
        %v1440 = vpop.permute.xlu0 %1439
        %v1442 = vadd.f32 %v1430, %v1436
        %v1443 = vadd.f32 %v1431, %v1436
        %v1444 = vadd.f32 %v1432, %v1440
        %v1445 = vadd.f32 %v1433, %v1440
        %v1446 = vxor.u32 %v1442, 2147483648
        %v1447 = vxor.u32 %v1443, 2147483648
        %v1448 = vxor.u32 %v1444, 2147483648
        %v1449 = vxor.u32 %v1445, 2147483648
        %v1450 = vmul.f32 %v1446, 1.442695
        %v1451 = vpow.pop %v1450
        %v1452 = vmul.f32 %v1447, 1.442695
        %v1453 = vpow.pop %v1452
        %v1454 = vmul.f32 %v1448, 1.442695
        %v1455 = vpow.pop %v1454
        %v1456 = vmul.f32 %v1449, 1.442695
        %v1457 = vpow.pop %v1456
        %v1458 = vadd.f32 %v1451, 1.0
        %v1459 = vadd.f32 %v1453, 1.0
        %v1460 = vadd.f32 %v1455, 1.0
        %v1461 = vadd.f32 %v1457, 1.0
        %v1462 = vrcp.pop %v1458
        %v1463 = vmul.f32 1.0, %v1462
        %v1464 = vrcp.pop %v1459
        %v1465 = vmul.f32 1.0, %v1464
        %v1466 = vrcp.pop %v1460
        %v1467 = vmul.f32 1.0, %v1466
        %v1468 = vrcp.pop %v1461
        %v1469 = vmul.f32 1.0, %v1468
        %v1470 = vmul.f32 %v1442, %v1463
        %v1471 = vmul.f32 %v1443, %v1465
        %v1472 = vmul.f32 %v1444, %v1467
        %v1473 = vmul.f32 %v1445, %v1469
        %1474 = vst [vmem:[%s271] sm:$0xff] %v1470
        %1475 = vst [vmem:[%s271 + $0x8] sm:$0xff] %v1471
        %1476 = vst [vmem:[%s271 + $0x10] sm:$0xff] %v1472
        %1477 = vst [vmem:[%s271 + $0x18] sm:$0xff] %v1473
        %s1478 = sand.u32 %s181, 1
        %s1479 = scalar_lea.sflag [#allocation3], %s1478
        %s1480 = sand.u32 %s181, 1
        %s1481 = smul.addr %s1480, 32
        %s1482 = scalar_lea.vmem [#allocation2], %s1481
        // Predicated region
        $region49: #{tpu_custom_call.1} parent=47 // pred_check
          %p1483 = pneg %p191
        $region50: #{tpu_custom_call.1} parent=47 // pred_check_branch
          %1485 = sbr.rel (%p1483) target = $region52
        $region51: #{tpu_custom_call.1} parent=47 // pred_region
          %s1487 = ssub.s32 512, 512
          %1488 = vsyncadd %s1479, %s1487
          %s1489 = smul.addr %s21, 4
          %s1490 = smul.addr %s1489, 128
          %s1491 = scalar_lea.hbm %s7, %s1490
          %s1492 = sshll.u32 %s1482, 4
          %s1493 = int_to_ptr.vmem [resolvable:$true] %s1492
          %1498 = dma.vmem_to_hbm [thread:$0]  %s1493, 512, %s1491, %s1479, 256, 256, 16
        $region52: #{tpu_custom_call.1} parent=47 // pred_fallthru
          _
      $region48: #{tpu_custom_call.1} parent=5 // pred_fallthru
        _
      %p1499 = scmp.le.s32.totalorder 2, %s16
      // Predicated region
      $region53: #{tpu_custom_call.1} parent=5 // pred_check
        %p1500 = pneg %p1499
      $region54: #{tpu_custom_call.1} parent=5 // pred_check_branch
        %1502 = sbr.rel (%p1500) target = $region56
      $region55: #{tpu_custom_call.1} parent=5 // pred_region
        %s1503 = ssub.s32 %s16, 2
        // Predicated region
        $region57: #{tpu_custom_call.1} parent=55 // pred_check
          %p1504 = pneg %p197
        $region58: #{tpu_custom_call.1} parent=55 // pred_check_branch
          %1506 = sbr.rel (%p1504) target = $region60
        $region59: #{tpu_custom_call.1} parent=55 // pred_region
          %s1507 = sand.u32 %s182, 1
          %s1508 = scalar_lea.sflag [#allocation3], %s1507
          %s1509 = sand.u32 %s182, 1
          %s1510 = smul.addr %s1509, 32
          %s1511 = scalar_lea.vmem [#allocation2], %s1510
          %1512 = dma.done %s1508, 512
        $region60: #{tpu_custom_call.1} parent=55 // pred_fallthru
          _
      $region56: #{tpu_custom_call.1} parent=5 // pred_fallthru
        _
    $region6: #{tpu_custom_call.1} parent=1 // loop_footer
      %s20 = sadd.s32 1, %s16
    $region7: #{tpu_custom_call.1} parent=1 // loop_footer_branch
      %15 = sbr.rel target = $region3
    $region8: #{tpu_custom_call.1} parent=1 // loop_exit
      _
    %1513 = vsyncpa [#allocation3], 1
    %s1514 = scalar_lea.sflag [#allocation3], 1
    %1515 = vsyncpa %s1514, 1

</llo_original>
